<compile_context>
chip_gen: v6e
topology: v6e:2x2x1
jax: 0.10.0
libtpu: 0.0.40
codegen_flags: <defaults>
</compile_context>

<pallas_src>
import functools

import jax
import jax.numpy as jnp
from jax.experimental import pallas as pl
from jax.experimental.pallas import tpu as pltpu


def _round_up(x, m):
    return (x + m - 1) // m * m


def _pick_time_block(seq_len, max_block):
    """Largest T <= max_block, preferring one that divides seq_len (no tail mask)."""
    max_block = max(1, min(max_block, seq_len))
    for t in range(max_block, max(max_block // 2, 1) - 1, -1):
        if seq_len % t == 0:
            return t
    return max_block


def _sigmoid(x):
    # One EUP (tanh) push instead of exp + reciprocal on the serial chain.
    return 0.5 * jnp.tanh(0.5 * x) + 0.5


# ----------------------------------------------------------------------------
# Pallas kernel: recurrent part of one LSTM layer.
#   grid = (batch_chunks "parallel", Sp // T "arbitrary")
#   gx_ref   : (T, Bc, 4*Hp)  precomputed x @ W_ih^T + bias (gate-major, padded)
#   whh_hbm  : (Hp, 4*Hp)     pre-transposed recurrent weight, raw HBM ref
# ----------------------------------------------------------------------------
def _lstm_recurrent_kernel(gx_ref, whh_hbm, out_ref, hN_ref, cN_ref,
                           whh_vmem, dma_sem, h_scr, c_scr, *,
                           hidden_pad, time_block, seq_len, needs_mask, unroll):
    t_blk = pl.program_id(1)
    Hp = hidden_pad
    T = time_block

    @pl.when(t_blk == 0)
    def _():
        # Grid-invariant W_hh^T: single-buffered, one DMA into scratch per
        # batch-chunk traversal (no double-buffered pipeline copy).
        cp = pltpu.make_async_copy(whh_hbm, whh_vmem, dma_sem)
        cp.start()
        cp.wait()
        h_scr[...] = jnp.zeros_like(h_scr)
        c_scr[...] = jnp.zeros_like(c_scr)

    def step(tt, carry):
        h, c = carry
        # gates_x[t] (streamed, possibly bf16 -> upcasts for free) +
        # h_prev @ W_hh^T with f32 accumulation on the MXU.
        gates = gx_ref[tt] + jnp.dot(h.astype(whh_vmem.dtype), whh_vmem[...],
                                     preferred_element_type=jnp.float32)
        # lane-aligned gate slabs (each Hp wide, Hp % 128 == 0)
        i_g = _sigmoid(gates[:, 0 * Hp:1 * Hp])
        f_g = _sigmoid(gates[:, 1 * Hp:2 * Hp])
        g_g = jnp.tanh(gates[:, 2 * Hp:3 * Hp])
        o_g = _sigmoid(gates[:, 3 * Hp:4 * Hp])
        c_new = f_g * c + i_g * g_g
        h_new = o_g * jnp.tanh(c_new)
        if needs_mask:  # only emitted when the time axis is padded
            keep = (t_blk * T + tt) < seq_len
            c_new = jnp.where(keep, c_new, c)
            h_new = jnp.where(keep, h_new, h)
        out_ref[tt] = h_new.astype(out_ref.dtype)
        return h_new, c_new

    h, c = jax.lax.fori_loop(0, T, step, (h_scr[...], c_scr[...]),
                             unroll=unroll)
    h_scr[...] = h
    c_scr[...] = c

    @pl.when(t_blk == pl.num_programs(1) - 1)
    def _():
        hN_ref[...] = h
        cN_ref[...] = c


def lstm_layer_pallas(x_pad, w_ih, w_hh, b_ih, b_hh, *, seq_len, time_block,
                      matmul_dtype=jnp.float32, batch_parallel=True):
    """One LSTM layer over padded input x_pad: (Sp, Bp, in_pad).

    Returns (outputs_padded (Sp, Bp, Hp) [matmul_dtype],
             h_N (Bp, Hp) f32, c_N (Bp, Hp) f32).
    Padded hidden lanes are exactly zero; padded batch rows never contaminate
    real rows (the recurrence is row-independent).
    """
    Sp, Bp, in_pad = x_pad.shape
    H = w_hh.shape[1]
    in_dim = w_ih.shape[1]
    Hp = _round_up(max(H, 128), 128)          # lane-aligned hidden
    T = time_block
    assert Sp % T == 0 and Bp % 8 == 0
    n_tblk = Sp // T
    needs_mask = Sp != seq_len

    # Batch-chunk grid axis ("parallel"): lets v7x's two TensorCores run
    # independent half-batch recurrences; harmless outer loop on v5e/v6e.
    if batch_parallel and Bp % 16 == 0:
        Bc = Bp // 2
    else:
        Bc = Bp
    n_bchunk = Bp // Bc

    # ---- hoisted input projection, emitted directly in the padded gate-major
    # layout (no relayout of the big activation tensor afterwards).
    w_ih_gm = w_ih.astype(jnp.float32).reshape(4, H, in_dim)
    w_ih_gm = jnp.pad(w_ih_gm, ((0, 0), (0, Hp - H), (0, in_pad - in_dim)))
    w_ih_gm = w_ih_gm.reshape(4 * Hp, in_pad).astype(matmul_dtype)
    bias_gm = jnp.pad((b_ih + b_hh).astype(jnp.float32).reshape(4, H),
                      ((0, 0), (0, Hp - H))).reshape(4 * Hp)
    gx = jnp.einsum("sbe,ge->sbg", x_pad.astype(matmul_dtype), w_ih_gm,
                    preferred_element_type=jnp.float32) + bias_gm
    gx = gx.astype(matmul_dtype)              # streamed array (bf16 halves DMA)

    # pre-transposed, gate-major, padded recurrent weight: (Hp, 4*Hp)
    whh_t = w_hh.astype(jnp.float32).T.reshape(H, 4, H)
    whh_t = jnp.pad(whh_t, ((0, Hp - H), (0, 0), (0, Hp - H)))
    whh_t = whh_t.reshape(Hp, 4 * Hp).astype(matmul_dtype)

    # Partial unroll when the per-step live set would spill the 64-vreg file.
    gate_vregs = Bc * 4 * Hp // 1024          # f32 vregs held by `gates`
    if gate_vregs <= 8:
        unroll = T
    elif gate_vregs <= 16:
        unroll = min(T, 4)
    else:
        unroll = min(T, 2)

    itemsize = jnp.dtype(matmul_dtype).itemsize
    vmem_bytes = (2 * T * Bc * 4 * Hp * itemsize     # gx block (double-buffered)
                  + 2 * T * Bc * Hp * itemsize       # outputs block
                  + 4 * Bc * Hp * 4                  # hN / cN output blocks
                  + Hp * 4 * Hp * itemsize           # W_hh^T scratch (one copy)
                  + 2 * Bc * Hp * 4)                 # h / c state scratch
    vmem_limit = int(min(max(2 * vmem_bytes + (4 << 20), 16 << 20), 100 << 20))

    kernel = functools.partial(
        _lstm_recurrent_kernel, hidden_pad=Hp, time_block=T, seq_len=seq_len,
        needs_mask=needs_mask, unroll=unroll)

    outputs, h_n, c_n = pl.pallas_call(
        kernel,
        out_shape=(
            jax.ShapeDtypeStruct((Sp, Bp, Hp), matmul_dtype),  # all hidden outs
            jax.ShapeDtypeStruct((Bp, Hp), jnp.float32),       # final h
            jax.ShapeDtypeStruct((Bp, Hp), jnp.float32),       # final c
        ),
        grid=(n_bchunk, n_tblk),
        in_specs=[
            pl.BlockSpec((T, Bc, 4 * Hp), lambda b, t: (t, b, 0)),  # gates_x
            pl.BlockSpec(memory_space=pl.ANY),    # W_hh^T stays in HBM; one DMA
        ],
        out_specs=(
            pl.BlockSpec((T, Bc, Hp), lambda b, t: (t, b, 0)),
            pl.BlockSpec((Bc, Hp), lambda b, t: (b, 0)),
            pl.BlockSpec((Bc, Hp), lambda b, t: (b, 0)),
        ),
        scratch_shapes=[
            pltpu.VMEM((Hp, 4 * Hp), matmul_dtype),   # resident W_hh^T
            pltpu.SemaphoreType.DMA(()),              # its copy semaphore
            pltpu.VMEM((Bc, Hp), jnp.float32),        # h state (persists)
            pltpu.VMEM((Bc, Hp), jnp.float32),        # c state (persists)
        ],
        compiler_params=pltpu.CompilerParams(
            dimension_semantics=("parallel", "arbitrary"),
            vmem_limit_bytes=vmem_limit),
    )(gx, whh_t)

    return outputs, h_n, c_n


# ----------------------------------------------------------------------------
# Encoder forward: embedding (glue) + stacked LSTM layers (Pallas kernels).
# ----------------------------------------------------------------------------
def encoder_forward(params, input_batch, *, matmul_dtype=jnp.float32,
                    time_block=32, batch_parallel=True):
    S, B = input_batch.shape
    H = params["lstm"][0]["w_hh"].shape[1]

    # embedding lookup: (S, B) int32 -> (S, B, E); dropout = identity (eval).
    embed = jnp.take(params["embedding"], input_batch, axis=0)

    Bp = _round_up(max(B, 8), 8)
    T = _pick_time_block(S, time_block)
    Sp = _round_up(S, T)

    # pad once (time + batch); padded activations are carried between layers
    # without slicing / re-padding.
    x = jnp.pad(embed, ((0, Sp - S), (0, Bp - B), (0, 0)))

    h_list, c_list = [], []
    for layer in params["lstm"]:
        x, h_n, c_n = lstm_layer_pallas(
            x, layer["w_ih"], layer["w_hh"], layer["b_ih"], layer["b_hh"],
            seq_len=S, time_block=T, matmul_dtype=matmul_dtype,
            batch_parallel=batch_parallel)
        h_list.append(h_n[:B, :H])
        c_list.append(c_n[:B, :H])
        # inter-layer dropout: identity (eval-mode)
    hidden = jnp.stack(h_list, axis=0)   # (n_layers, B, H)
    cell = jnp.stack(c_list, axis=0)     # (n_layers, B, H)
    return hidden, cell


# ----------------------------------------------------------------------------
# Pure-JAX reference (lax.scan LSTM) for correctness check.
# ----------------------------------------------------------------------------
def lstm_layer_ref(x, w_ih, w_hh, b_ih, b_hh):
    S, B, E = x.shape
    H = w_hh.shape[1]

    def step(carry, x_t):
        h, c = carry
        gates = x_t @ w_ih.T + h @ w_hh.T + b_ih + b_hh
        i = jax.nn.sigmoid(gates[:, 0 * H:1 * H])
        f = jax.nn.sigmoid(gates[:, 1 * H:2 * H])
        g = jnp.tanh(gates[:, 2 * H:3 * H])
        o = jax.nn.sigmoid(gates[:, 3 * H:4 * H])
        c_new = f * c + i * g
        h_new = o * jnp.tanh(c_new)
        return (h_new, c_new), h_new

    h0 = jnp.zeros((B, H), jnp.float32)
    c0 = jnp.zeros((B, H), jnp.float32)
    (h_n, c_n), outs = jax.lax.scan(step, (h0, c0), x)
    return outs, h_n, c_n


def encoder_forward_ref(params, input_batch):
    x = jnp.take(params["embedding"], input_batch, axis=0)
    h_list, c_list = [], []
    for layer in params["lstm"]:
        x, h_n, c_n = lstm_layer_ref(
            x, layer["w_ih"], layer["w_hh"], layer["b_ih"], layer["b_hh"])
        h_list.append(h_n)
        c_list.append(c_n)
    return jnp.stack(h_list, 0), jnp.stack(c_list, 0)


# ----------------------------------------------------------------------------
# Deterministic parameter init (PyTorch-style uniform(-1/sqrt(H), 1/sqrt(H))).
# ----------------------------------------------------------------------------
def init_params(key, vocab_len, embedding_dim, hidden_dim, n_layers):
    keys = jax.random.split(key, 1 + 4 * n_layers)
    params = {"embedding": jax.random.normal(
        keys[0], (vocab_len, embedding_dim), jnp.float32)}
    bound = 1.0 / (hidden_dim ** 0.5)
    layers = []
    for l in range(n_layers):
        in_dim = embedding_dim if l == 0 else hidden_dim
        k = keys[1 + 4 * l:1 + 4 * (l + 1)]
        layers.append({
            "w_ih": jax.random.uniform(k[0], (4 * hidden_dim, in_dim),
                                       jnp.float32, -bound, bound),
            "w_hh": jax.random.uniform(k[1], (4 * hidden_dim, hidden_dim),
                                       jnp.float32, -bound, bound),
            "b_ih": jax.random.uniform(k[2], (4 * hidden_dim,),
                                       jnp.float32, -bound, bound),
            "b_hh": jax.random.uniform(k[3], (4 * hidden_dim,),
                                       jnp.float32, -bound, bound),
        })
    params["lstm"] = layers
    return params


if __name__ == "__main__":
    vocab_len = 50
    embedding_dim = 32
    hidden_dim = 32
    n_layers = 2
    seq_len = 8
    batch = 2

    key = jax.random.PRNGKey(0)
    k_param, k_tok = jax.random.split(key)
    params = init_params(k_param, vocab_len, embedding_dim, hidden_dim, n_layers)
    input_batch = jax.random.randint(k_tok, (seq_len, batch), 0, vocab_len,
                                     dtype=jnp.int32)

    hidden_ref, cell_ref = encoder_forward_ref(params, input_batch)

    # f32 matmul path: tight correctness check against the lax.scan reference.
    hidden, cell = encoder_forward(params, input_batch,
                                   matmul_dtype=jnp.float32)
    jax.block_until_ready((hidden, cell))
    assert hidden.shape == (n_layers, batch, hidden_dim)
    assert cell.shape == (n_layers, batch, hidden_dim)
    assert jnp.allclose(hidden, hidden_ref, atol=1e-4, rtol=1e-4)
    assert jnp.allclose(cell, cell_ref, atol=1e-4, rtol=1e-4)

    # bf16 matmul/stream path (works on v5e/v6e/v7x MXU): looser check,
    # h/c state and elementwise math stay f32.
    hidden_bf, cell_bf = encoder_forward(params, input_batch,
                                         matmul_dtype=jnp.bfloat16)
    jax.block_until_ready((hidden_bf, cell_bf))
    assert jnp.allclose(hidden_bf, hidden_ref, atol=1e-1)
    assert jnp.allclose(cell_bf, cell_ref, atol=1e-1)

    print("KERNEL_OK")
</pallas_src>

<mosaic_0001>
module attributes {stable_mosaic.version = 11 : i64} {
  func.func @_lstm_recurrent_kernel(%arg0: i32, %arg1: i32, %arg2: memref<8x8x512xf32, #tpu.memory_space<vmem>>, %arg3: memref<128x512xf32, #tpu.memory_space<any>>, %arg4: memref<8x8x128xf32, #tpu.memory_space<vmem>>, %arg5: memref<8x128xf32, #tpu.memory_space<vmem>>, %arg6: memref<8x128xf32, #tpu.memory_space<vmem>>, %arg7: memref<128x512xf32, #tpu.memory_space<vmem>>, %arg8: memref<!tpu.dma_semaphore, #tpu.memory_space<semaphore_mem>>, %arg9: memref<8x128xf32, #tpu.memory_space<vmem>>, %arg10: memref<8x128xf32, #tpu.memory_space<vmem>>) attributes {dimension_semantics = [#tpu.dimension_semantics<parallel>, #tpu.dimension_semantics<arbitrary>], iteration_bounds = array<i64: 1, 1>, scalar_prefetch = 0 : i64, scratch_operands = 4 : i64, tpu.core_type = #tpu.core_type<tc>, window_params = [{transform_indices = @transform_0, window_bounds = array<i64: 8, 8, 512>}, {}, {transform_indices = @transform_2, window_bounds = array<i64: 8, 8, 128>}, {transform_indices = @transform_3, window_bounds = array<i64: 8, 128>}, {transform_indices = @transform_4, window_bounds = array<i64: 8, 128>}]} {
    %c0_i32 = arith.constant 0 : i32
    %0 = arith.cmpi eq, %arg1, %c0_i32 : i32
    %1 = arith.extui %0 : i1 to i32
    %c0_i32_0 = arith.constant 0 : i32
    %2 = arith.cmpi ne, %1, %c0_i32_0 : i32
    scf.if %2 {
      tpu.enqueue_dma source(%arg3 : memref<128x512xf32, #tpu.memory_space<any>>) target(%arg7 : memref<128x512xf32, #tpu.memory_space<vmem>>) target_semaphore(%arg8 : memref<!tpu.dma_semaphore, #tpu.memory_space<semaphore_mem>>)
      tpu.wait_dma2 semaphore(%arg8 : memref<!tpu.dma_semaphore, #tpu.memory_space<semaphore_mem>>) src(%arg3 : memref<128x512xf32, #tpu.memory_space<any>>) dst(%arg7 : memref<128x512xf32, #tpu.memory_space<vmem>>)
      %cst_138 = arith.constant 0.000000e+00 : f32
      %338 = vector.broadcast %cst_138 : f32 to vector<8x128xf32>
      %c0_139 = arith.constant 0 : index
      %c0_140 = arith.constant 0 : index
      %339 = vector.load %arg9[%c0_139, %c0_140] : memref<8x128xf32, #tpu.memory_space<vmem>>, vector<8x128xf32>
      tpu.vector_store %arg9[%c0_139, %c0_140], %338 {strides = array<i32>} : memref<8x128xf32, #tpu.memory_space<vmem>>, vector<8x128xf32>,
      %cst_141 = arith.constant 0.000000e+00 : f32
      %340 = vector.broadcast %cst_141 : f32 to vector<8x128xf32>
      %c0_142 = arith.constant 0 : index
      %c0_143 = arith.constant 0 : index
      %341 = vector.load %arg10[%c0_142, %c0_143] : memref<8x128xf32, #tpu.memory_space<vmem>>, vector<8x128xf32>
      tpu.vector_store %arg10[%c0_142, %c0_143], %340 {strides = array<i32>} : memref<8x128xf32, #tpu.memory_space<vmem>>, vector<8x128xf32>,
    } else {
    }
    %c0 = arith.constant 0 : index
    %c0_1 = arith.constant 0 : index
    %3 = vector.load %arg9[%c0, %c0_1] : memref<8x128xf32, #tpu.memory_space<vmem>>, vector<8x128xf32>
    %c0_2 = arith.constant 0 : index
    %c0_3 = arith.constant 0 : index
    %4 = vector.load %arg10[%c0_2, %c0_3] : memref<8x128xf32, #tpu.memory_space<vmem>>, vector<8x128xf32>
    %c0_i32_4 = arith.constant 0 : i32
    %5 = arith.index_cast %c0_i32_4 : i32 to index
    %c0_5 = arith.constant 0 : index
    %c0_6 = arith.constant 0 : index
    %6 = vector.load %arg2[%5, %c0_5, %c0_6] : memref<8x8x512xf32, #tpu.memory_space<vmem>>, vector<1x8x512xf32>
    %7 = vector.shape_cast %6 : vector<1x8x512xf32> to vector<8x512xf32>
    %c0_7 = arith.constant 0 : index
    %c0_8 = arith.constant 0 : index
    %8 = vector.load %arg7[%c0_7, %c0_8] : memref<128x512xf32, #tpu.memory_space<vmem>>, vector<128x512xf32>
    %cst = arith.constant dense<0.000000e+00> : vector<8x512xf32>
    %9 = tpu.matmul %3, %8, %cst {dimension_numbers = #tpu.dot_dimension_numbers<[1], [0], [0], [1], [0, 0, 1, 1], [], []>} : vector<8x128xf32>, vector<128x512xf32>, vector<8x512xf32> -> vector<8x512xf32>
    %10 = arith.addf %7, %9 : vector<8x512xf32>
    %11 = vector.extract_strided_slice %10 {offsets = [0, 0], sizes = [8, 128], strides = [1, 1]} : vector<8x512xf32> to vector<8x128xf32>
    %cst_9 = arith.constant 5.000000e-01 : f32
    %12 = vector.broadcast %cst_9 : f32 to vector<8x128xf32>
    %13 = arith.mulf %12, %11 : vector<8x128xf32>
    %14 = math.tanh %13 : vector<8x128xf32>
    %cst_10 = arith.constant 5.000000e-01 : f32
    %15 = vector.broadcast %cst_10 : f32 to vector<8x128xf32>
    %16 = arith.mulf %15, %14 : vector<8x128xf32>
    %cst_11 = arith.constant 5.000000e-01 : f32
    %17 = vector.broadcast %cst_11 : f32 to vector<8x128xf32>
    %18 = arith.addf %16, %17 : vector<8x128xf32>
    %19 = vector.extract_strided_slice %10 {offsets = [0, 128], sizes = [8, 128], strides = [1, 1]} : vector<8x512xf32> to vector<8x128xf32>
    %cst_12 = arith.constant 5.000000e-01 : f32
    %20 = vector.broadcast %cst_12 : f32 to vector<8x128xf32>
    %21 = arith.mulf %20, %19 : vector<8x128xf32>
    %22 = math.tanh %21 : vector<8x128xf32>
    %cst_13 = arith.constant 5.000000e-01 : f32
    %23 = vector.broadcast %cst_13 : f32 to vector<8x128xf32>
    %24 = arith.mulf %23, %22 : vector<8x128xf32>
    %cst_14 = arith.constant 5.000000e-01 : f32
    %25 = vector.broadcast %cst_14 : f32 to vector<8x128xf32>
    %26 = arith.addf %24, %25 : vector<8x128xf32>
    %27 = vector.extract_strided_slice %10 {offsets = [0, 256], sizes = [8, 128], strides = [1, 1]} : vector<8x512xf32> to vector<8x128xf32>
    %28 = math.tanh %27 : vector<8x128xf32>
    %29 = vector.extract_strided_slice %10 {offsets = [0, 384], sizes = [8, 128], strides = [1, 1]} : vector<8x512xf32> to vector<8x128xf32>
    %cst_15 = arith.constant 5.000000e-01 : f32
    %30 = vector.broadcast %cst_15 : f32 to vector<8x128xf32>
    %31 = arith.mulf %30, %29 : vector<8x128xf32>
    %32 = math.tanh %31 : vector<8x128xf32>
    %cst_16 = arith.constant 5.000000e-01 : f32
    %33 = vector.broadcast %cst_16 : f32 to vector<8x128xf32>
    %34 = arith.mulf %33, %32 : vector<8x128xf32>
    %cst_17 = arith.constant 5.000000e-01 : f32
    %35 = vector.broadcast %cst_17 : f32 to vector<8x128xf32>
    %36 = arith.addf %34, %35 : vector<8x128xf32>
    %37 = arith.mulf %26, %4 : vector<8x128xf32>
    %38 = arith.mulf %18, %28 : vector<8x128xf32>
    %39 = arith.addf %37, %38 : vector<8x128xf32>
    %40 = math.tanh %39 : vector<8x128xf32>
    %41 = arith.mulf %36, %40 : vector<8x128xf32>
    %42 = arith.index_cast %c0_i32_4 : i32 to index
    %c0_18 = arith.constant 0 : index
    %c0_19 = arith.constant 0 : index
    %43 = vector.load %arg4[%42, %c0_18, %c0_19] : memref<8x8x128xf32, #tpu.memory_space<vmem>>, vector<1x8x128xf32>
    %44 = vector.shape_cast %43 : vector<1x8x128xf32> to vector<8x128xf32>
    %45 = vector.shape_cast %41 : vector<8x128xf32> to vector<1x8x128xf32>
    tpu.vector_store %arg4[%42, %c0_18, %c0_19], %45 {strides = array<i32>} : memref<8x8x128xf32, #tpu.memory_space<vmem>>, vector<1x8x128xf32>,
    %c1_i32 = arith.constant 1 : i32
    %46 = arith.index_cast %c1_i32 : i32 to index
    %c0_20 = arith.constant 0 : index
    %c0_21 = arith.constant 0 : index
    %47 = vector.load %arg2[%46, %c0_20, %c0_21] : memref<8x8x512xf32, #tpu.memory_space<vmem>>, vector<1x8x512xf32>
    %48 = vector.shape_cast %47 : vector<1x8x512xf32> to vector<8x512xf32>
    %c0_22 = arith.constant 0 : index
    %c0_23 = arith.constant 0 : index
    %49 = vector.load %arg7[%c0_22, %c0_23] : memref<128x512xf32, #tpu.memory_space<vmem>>, vector<128x512xf32>
    %cst_24 = arith.constant dense<0.000000e+00> : vector<8x512xf32>
    %50 = tpu.matmul %41, %49, %cst_24 {dimension_numbers = #tpu.dot_dimension_numbers<[1], [0], [0], [1], [0, 0, 1, 1], [], []>} : vector<8x128xf32>, vector<128x512xf32>, vector<8x512xf32> -> vector<8x512xf32>
    %51 = arith.addf %48, %50 : vector<8x512xf32>
    %52 = vector.extract_strided_slice %51 {offsets = [0, 0], sizes = [8, 128], strides = [1, 1]} : vector<8x512xf32> to vector<8x128xf32>
    %cst_25 = arith.constant 5.000000e-01 : f32
    %53 = vector.broadcast %cst_25 : f32 to vector<8x128xf32>
    %54 = arith.mulf %53, %52 : vector<8x128xf32>
    %55 = math.tanh %54 : vector<8x128xf32>
    %cst_26 = arith.constant 5.000000e-01 : f32
    %56 = vector.broadcast %cst_26 : f32 to vector<8x128xf32>
    %57 = arith.mulf %56, %55 : vector<8x128xf32>
    %cst_27 = arith.constant 5.000000e-01 : f32
    %58 = vector.broadcast %cst_27 : f32 to vector<8x128xf32>
    %59 = arith.addf %57, %58 : vector<8x128xf32>
    %60 = vector.extract_strided_slice %51 {offsets = [0, 128], sizes = [8, 128], strides = [1, 1]} : vector<8x512xf32> to vector<8x128xf32>
    %cst_28 = arith.constant 5.000000e-01 : f32
    %61 = vector.broadcast %cst_28 : f32 to vector<8x128xf32>
    %62 = arith.mulf %61, %60 : vector<8x128xf32>
    %63 = math.tanh %62 : vector<8x128xf32>
    %cst_29 = arith.constant 5.000000e-01 : f32
    %64 = vector.broadcast %cst_29 : f32 to vector<8x128xf32>
    %65 = arith.mulf %64, %63 : vector<8x128xf32>
    %cst_30 = arith.constant 5.000000e-01 : f32
    %66 = vector.broadcast %cst_30 : f32 to vector<8x128xf32>
    %67 = arith.addf %65, %66 : vector<8x128xf32>
    %68 = vector.extract_strided_slice %51 {offsets = [0, 256], sizes = [8, 128], strides = [1, 1]} : vector<8x512xf32> to vector<8x128xf32>
    %69 = math.tanh %68 : vector<8x128xf32>
    %70 = vector.extract_strided_slice %51 {offsets = [0, 384], sizes = [8, 128], strides = [1, 1]} : vector<8x512xf32> to vector<8x128xf32>
    %cst_31 = arith.constant 5.000000e-01 : f32
    %71 = vector.broadcast %cst_31 : f32 to vector<8x128xf32>
    %72 = arith.mulf %71, %70 : vector<8x128xf32>
    %73 = math.tanh %72 : vector<8x128xf32>
    %cst_32 = arith.constant 5.000000e-01 : f32
    %74 = vector.broadcast %cst_32 : f32 to vector<8x128xf32>
    %75 = arith.mulf %74, %73 : vector<8x128xf32>
    %cst_33 = arith.constant 5.000000e-01 : f32
    %76 = vector.broadcast %cst_33 : f32 to vector<8x128xf32>
    %77 = arith.addf %75, %76 : vector<8x128xf32>
    %78 = arith.mulf %67, %39 : vector<8x128xf32>
    %79 = arith.mulf %59, %69 : vector<8x128xf32>
    %80 = arith.addf %78, %79 : vector<8x128xf32>
    %81 = math.tanh %80 : vector<8x128xf32>
    %82 = arith.mulf %77, %81 : vector<8x128xf32>
    %83 = arith.index_cast %c1_i32 : i32 to index
    %c0_34 = arith.constant 0 : index
    %c0_35 = arith.constant 0 : index
    %84 = vector.load %arg4[%83, %c0_34, %c0_35] : memref<8x8x128xf32, #tpu.memory_space<vmem>>, vector<1x8x128xf32>
    %85 = vector.shape_cast %84 : vector<1x8x128xf32> to vector<8x128xf32>
    %86 = vector.shape_cast %82 : vector<8x128xf32> to vector<1x8x128xf32>
    tpu.vector_store %arg4[%83, %c0_34, %c0_35], %86 {strides = array<i32>} : memref<8x8x128xf32, #tpu.memory_space<vmem>>, vector<1x8x128xf32>,
    %c2_i32 = arith.constant 2 : i32
    %87 = arith.index_cast %c2_i32 : i32 to index
    %c0_36 = arith.constant 0 : index
    %c0_37 = arith.constant 0 : index
    %88 = vector.load %arg2[%87, %c0_36, %c0_37] : memref<8x8x512xf32, #tpu.memory_space<vmem>>, vector<1x8x512xf32>
    %89 = vector.shape_cast %88 : vector<1x8x512xf32> to vector<8x512xf32>
    %c0_38 = arith.constant 0 : index
    %c0_39 = arith.constant 0 : index
    %90 = vector.load %arg7[%c0_38, %c0_39] : memref<128x512xf32, #tpu.memory_space<vmem>>, vector<128x512xf32>
    %cst_40 = arith.constant dense<0.000000e+00> : vector<8x512xf32>
    %91 = tpu.matmul %82, %90, %cst_40 {dimension_numbers = #tpu.dot_dimension_numbers<[1], [0], [0], [1], [0, 0, 1, 1], [], []>} : vector<8x128xf32>, vector<128x512xf32>, vector<8x512xf32> -> vector<8x512xf32>
    %92 = arith.addf %89, %91 : vector<8x512xf32>
    %93 = vector.extract_strided_slice %92 {offsets = [0, 0], sizes = [8, 128], strides = [1, 1]} : vector<8x512xf32> to vector<8x128xf32>
    %cst_41 = arith.constant 5.000000e-01 : f32
    %94 = vector.broadcast %cst_41 : f32 to vector<8x128xf32>
    %95 = arith.mulf %94, %93 : vector<8x128xf32>
    %96 = math.tanh %95 : vector<8x128xf32>
    %cst_42 = arith.constant 5.000000e-01 : f32
    %97 = vector.broadcast %cst_42 : f32 to vector<8x128xf32>
    %98 = arith.mulf %97, %96 : vector<8x128xf32>
    %cst_43 = arith.constant 5.000000e-01 : f32
    %99 = vector.broadcast %cst_43 : f32 to vector<8x128xf32>
    %100 = arith.addf %98, %99 : vector<8x128xf32>
    %101 = vector.extract_strided_slice %92 {offsets = [0, 128], sizes = [8, 128], strides = [1, 1]} : vector<8x512xf32> to vector<8x128xf32>
    %cst_44 = arith.constant 5.000000e-01 : f32
    %102 = vector.broadcast %cst_44 : f32 to vector<8x128xf32>
    %103 = arith.mulf %102, %101 : vector<8x128xf32>
    %104 = math.tanh %103 : vector<8x128xf32>
    %cst_45 = arith.constant 5.000000e-01 : f32
    %105 = vector.broadcast %cst_45 : f32 to vector<8x128xf32>
    %106 = arith.mulf %105, %104 : vector<8x128xf32>
    %cst_46 = arith.constant 5.000000e-01 : f32
    %107 = vector.broadcast %cst_46 : f32 to vector<8x128xf32>
    %108 = arith.addf %106, %107 : vector<8x128xf32>
    %109 = vector.extract_strided_slice %92 {offsets = [0, 256], sizes = [8, 128], strides = [1, 1]} : vector<8x512xf32> to vector<8x128xf32>
    %110 = math.tanh %109 : vector<8x128xf32>
    %111 = vector.extract_strided_slice %92 {offsets = [0, 384], sizes = [8, 128], strides = [1, 1]} : vector<8x512xf32> to vector<8x128xf32>
    %cst_47 = arith.constant 5.000000e-01 : f32
    %112 = vector.broadcast %cst_47 : f32 to vector<8x128xf32>
    %113 = arith.mulf %112, %111 : vector<8x128xf32>
    %114 = math.tanh %113 : vector<8x128xf32>
    %cst_48 = arith.constant 5.000000e-01 : f32
    %115 = vector.broadcast %cst_48 : f32 to vector<8x128xf32>
    %116 = arith.mulf %115, %114 : vector<8x128xf32>
    %cst_49 = arith.constant 5.000000e-01 : f32
    %117 = vector.broadcast %cst_49 : f32 to vector<8x128xf32>
    %118 = arith.addf %116, %117 : vector<8x128xf32>
    %119 = arith.mulf %108, %80 : vector<8x128xf32>
    %120 = arith.mulf %100, %110 : vector<8x128xf32>
    %121 = arith.addf %119, %120 : vector<8x128xf32>
    %122 = math.tanh %121 : vector<8x128xf32>
    %123 = arith.mulf %118, %122 : vector<8x128xf32>
    %124 = arith.index_cast %c2_i32 : i32 to index
    %c0_50 = arith.constant 0 : index
    %c0_51 = arith.constant 0 : index
    %125 = vector.load %arg4[%124, %c0_50, %c0_51] : memref<8x8x128xf32, #tpu.memory_space<vmem>>, vector<1x8x128xf32>
    %126 = vector.shape_cast %125 : vector<1x8x128xf32> to vector<8x128xf32>
    %127 = vector.shape_cast %123 : vector<8x128xf32> to vector<1x8x128xf32>
    tpu.vector_store %arg4[%124, %c0_50, %c0_51], %127 {strides = array<i32>} : memref<8x8x128xf32, #tpu.memory_space<vmem>>, vector<1x8x128xf32>,
    %c3_i32 = arith.constant 3 : i32
    %128 = arith.index_cast %c3_i32 : i32 to index
    %c0_52 = arith.constant 0 : index
    %c0_53 = arith.constant 0 : index
    %129 = vector.load %arg2[%128, %c0_52, %c0_53] : memref<8x8x512xf32, #tpu.memory_space<vmem>>, vector<1x8x512xf32>
    %130 = vector.shape_cast %129 : vector<1x8x512xf32> to vector<8x512xf32>
    %c0_54 = arith.constant 0 : index
    %c0_55 = arith.constant 0 : index
    %131 = vector.load %arg7[%c0_54, %c0_55] : memref<128x512xf32, #tpu.memory_space<vmem>>, vector<128x512xf32>
    %cst_56 = arith.constant dense<0.000000e+00> : vector<8x512xf32>
    %132 = tpu.matmul %123, %131, %cst_56 {dimension_numbers = #tpu.dot_dimension_numbers<[1], [0], [0], [1], [0, 0, 1, 1], [], []>} : vector<8x128xf32>, vector<128x512xf32>, vector<8x512xf32> -> vector<8x512xf32>
    %133 = arith.addf %130, %132 : vector<8x512xf32>
    %134 = vector.extract_strided_slice %133 {offsets = [0, 0], sizes = [8, 128], strides = [1, 1]} : vector<8x512xf32> to vector<8x128xf32>
    %cst_57 = arith.constant 5.000000e-01 : f32
    %135 = vector.broadcast %cst_57 : f32 to vector<8x128xf32>
    %136 = arith.mulf %135, %134 : vector<8x128xf32>
    %137 = math.tanh %136 : vector<8x128xf32>
    %cst_58 = arith.constant 5.000000e-01 : f32
    %138 = vector.broadcast %cst_58 : f32 to vector<8x128xf32>
    %139 = arith.mulf %138, %137 : vector<8x128xf32>
    %cst_59 = arith.constant 5.000000e-01 : f32
    %140 = vector.broadcast %cst_59 : f32 to vector<8x128xf32>
    %141 = arith.addf %139, %140 : vector<8x128xf32>
    %142 = vector.extract_strided_slice %133 {offsets = [0, 128], sizes = [8, 128], strides = [1, 1]} : vector<8x512xf32> to vector<8x128xf32>
    %cst_60 = arith.constant 5.000000e-01 : f32
    %143 = vector.broadcast %cst_60 : f32 to vector<8x128xf32>
    %144 = arith.mulf %143, %142 : vector<8x128xf32>
    %145 = math.tanh %144 : vector<8x128xf32>
    %cst_61 = arith.constant 5.000000e-01 : f32
    %146 = vector.broadcast %cst_61 : f32 to vector<8x128xf32>
    %147 = arith.mulf %146, %145 : vector<8x128xf32>
    %cst_62 = arith.constant 5.000000e-01 : f32
    %148 = vector.broadcast %cst_62 : f32 to vector<8x128xf32>
    %149 = arith.addf %147, %148 : vector<8x128xf32>
    %150 = vector.extract_strided_slice %133 {offsets = [0, 256], sizes = [8, 128], strides = [1, 1]} : vector<8x512xf32> to vector<8x128xf32>
    %151 = math.tanh %150 : vector<8x128xf32>
    %152 = vector.extract_strided_slice %133 {offsets = [0, 384], sizes = [8, 128], strides = [1, 1]} : vector<8x512xf32> to vector<8x128xf32>
    %cst_63 = arith.constant 5.000000e-01 : f32
    %153 = vector.broadcast %cst_63 : f32 to vector<8x128xf32>
    %154 = arith.mulf %153, %152 : vector<8x128xf32>
    %155 = math.tanh %154 : vector<8x128xf32>
    %cst_64 = arith.constant 5.000000e-01 : f32
    %156 = vector.broadcast %cst_64 : f32 to vector<8x128xf32>
    %157 = arith.mulf %156, %155 : vector<8x128xf32>
    %cst_65 = arith.constant 5.000000e-01 : f32
    %158 = vector.broadcast %cst_65 : f32 to vector<8x128xf32>
    %159 = arith.addf %157, %158 : vector<8x128xf32>
    %160 = arith.mulf %149, %121 : vector<8x128xf32>
    %161 = arith.mulf %141, %151 : vector<8x128xf32>
    %162 = arith.addf %160, %161 : vector<8x128xf32>
    %163 = math.tanh %162 : vector<8x128xf32>
    %164 = arith.mulf %159, %163 : vector<8x128xf32>
    %165 = arith.index_cast %c3_i32 : i32 to index
    %c0_66 = arith.constant 0 : index
    %c0_67 = arith.constant 0 : index
    %166 = vector.load %arg4[%165, %c0_66, %c0_67] : memref<8x8x128xf32, #tpu.memory_space<vmem>>, vector<1x8x128xf32>
    %167 = vector.shape_cast %166 : vector<1x8x128xf32> to vector<8x128xf32>
    %168 = vector.shape_cast %164 : vector<8x128xf32> to vector<1x8x128xf32>
    tpu.vector_store %arg4[%165, %c0_66, %c0_67], %168 {strides = array<i32>} : memref<8x8x128xf32, #tpu.memory_space<vmem>>, vector<1x8x128xf32>,
    %c4_i32 = arith.constant 4 : i32
    %169 = arith.index_cast %c4_i32 : i32 to index
    %c0_68 = arith.constant 0 : index
    %c0_69 = arith.constant 0 : index
    %170 = vector.load %arg2[%169, %c0_68, %c0_69] : memref<8x8x512xf32, #tpu.memory_space<vmem>>, vector<1x8x512xf32>
    %171 = vector.shape_cast %170 : vector<1x8x512xf32> to vector<8x512xf32>
    %c0_70 = arith.constant 0 : index
    %c0_71 = arith.constant 0 : index
    %172 = vector.load %arg7[%c0_70, %c0_71] : memref<128x512xf32, #tpu.memory_space<vmem>>, vector<128x512xf32>
    %cst_72 = arith.constant dense<0.000000e+00> : vector<8x512xf32>
    %173 = tpu.matmul %164, %172, %cst_72 {dimension_numbers = #tpu.dot_dimension_numbers<[1], [0], [0], [1], [0, 0, 1, 1], [], []>} : vector<8x128xf32>, vector<128x512xf32>, vector<8x512xf32> -> vector<8x512xf32>
    %174 = arith.addf %171, %173 : vector<8x512xf32>
    %175 = vector.extract_strided_slice %174 {offsets = [0, 0], sizes = [8, 128], strides = [1, 1]} : vector<8x512xf32> to vector<8x128xf32>
    %cst_73 = arith.constant 5.000000e-01 : f32
    %176 = vector.broadcast %cst_73 : f32 to vector<8x128xf32>
    %177 = arith.mulf %176, %175 : vector<8x128xf32>
    %178 = math.tanh %177 : vector<8x128xf32>
    %cst_74 = arith.constant 5.000000e-01 : f32
    %179 = vector.broadcast %cst_74 : f32 to vector<8x128xf32>
    %180 = arith.mulf %179, %178 : vector<8x128xf32>
    %cst_75 = arith.constant 5.000000e-01 : f32
    %181 = vector.broadcast %cst_75 : f32 to vector<8x128xf32>
    %182 = arith.addf %180, %181 : vector<8x128xf32>
    %183 = vector.extract_strided_slice %174 {offsets = [0, 128], sizes = [8, 128], strides = [1, 1]} : vector<8x512xf32> to vector<8x128xf32>
    %cst_76 = arith.constant 5.000000e-01 : f32
    %184 = vector.broadcast %cst_76 : f32 to vector<8x128xf32>
    %185 = arith.mulf %184, %183 : vector<8x128xf32>
    %186 = math.tanh %185 : vector<8x128xf32>
    %cst_77 = arith.constant 5.000000e-01 : f32
    %187 = vector.broadcast %cst_77 : f32 to vector<8x128xf32>
    %188 = arith.mulf %187, %186 : vector<8x128xf32>
    %cst_78 = arith.constant 5.000000e-01 : f32
    %189 = vector.broadcast %cst_78 : f32 to vector<8x128xf32>
    %190 = arith.addf %188, %189 : vector<8x128xf32>
    %191 = vector.extract_strided_slice %174 {offsets = [0, 256], sizes = [8, 128], strides = [1, 1]} : vector<8x512xf32> to vector<8x128xf32>
    %192 = math.tanh %191 : vector<8x128xf32>
    %193 = vector.extract_strided_slice %174 {offsets = [0, 384], sizes = [8, 128], strides = [1, 1]} : vector<8x512xf32> to vector<8x128xf32>
    %cst_79 = arith.constant 5.000000e-01 : f32
    %194 = vector.broadcast %cst_79 : f32 to vector<8x128xf32>
    %195 = arith.mulf %194, %193 : vector<8x128xf32>
    %196 = math.tanh %195 : vector<8x128xf32>
    %cst_80 = arith.constant 5.000000e-01 : f32
    %197 = vector.broadcast %cst_80 : f32 to vector<8x128xf32>
    %198 = arith.mulf %197, %196 : vector<8x128xf32>
    %cst_81 = arith.constant 5.000000e-01 : f32
    %199 = vector.broadcast %cst_81 : f32 to vector<8x128xf32>
    %200 = arith.addf %198, %199 : vector<8x128xf32>
    %201 = arith.mulf %190, %162 : vector<8x128xf32>
    %202 = arith.mulf %182, %192 : vector<8x128xf32>
    %203 = arith.addf %201, %202 : vector<8x128xf32>
    %204 = math.tanh %203 : vector<8x128xf32>
    %205 = arith.mulf %200, %204 : vector<8x128xf32>
    %206 = arith.index_cast %c4_i32 : i32 to index
    %c0_82 = arith.constant 0 : index
    %c0_83 = arith.constant 0 : index
    %207 = vector.load %arg4[%206, %c0_82, %c0_83] : memref<8x8x128xf32, #tpu.memory_space<vmem>>, vector<1x8x128xf32>
    %208 = vector.shape_cast %207 : vector<1x8x128xf32> to vector<8x128xf32>
    %209 = vector.shape_cast %205 : vector<8x128xf32> to vector<1x8x128xf32>
    tpu.vector_store %arg4[%206, %c0_82, %c0_83], %209 {strides = array<i32>} : memref<8x8x128xf32, #tpu.memory_space<vmem>>, vector<1x8x128xf32>,
    %c5_i32 = arith.constant 5 : i32
    %210 = arith.index_cast %c5_i32 : i32 to index
    %c0_84 = arith.constant 0 : index
    %c0_85 = arith.constant 0 : index
    %211 = vector.load %arg2[%210, %c0_84, %c0_85] : memref<8x8x512xf32, #tpu.memory_space<vmem>>, vector<1x8x512xf32>
    %212 = vector.shape_cast %211 : vector<1x8x512xf32> to vector<8x512xf32>
    %c0_86 = arith.constant 0 : index
    %c0_87 = arith.constant 0 : index
    %213 = vector.load %arg7[%c0_86, %c0_87] : memref<128x512xf32, #tpu.memory_space<vmem>>, vector<128x512xf32>
    %cst_88 = arith.constant dense<0.000000e+00> : vector<8x512xf32>
    %214 = tpu.matmul %205, %213, %cst_88 {dimension_numbers = #tpu.dot_dimension_numbers<[1], [0], [0], [1], [0, 0, 1, 1], [], []>} : vector<8x128xf32>, vector<128x512xf32>, vector<8x512xf32> -> vector<8x512xf32>
    %215 = arith.addf %212, %214 : vector<8x512xf32>
    %216 = vector.extract_strided_slice %215 {offsets = [0, 0], sizes = [8, 128], strides = [1, 1]} : vector<8x512xf32> to vector<8x128xf32>
    %cst_89 = arith.constant 5.000000e-01 : f32
    %217 = vector.broadcast %cst_89 : f32 to vector<8x128xf32>
    %218 = arith.mulf %217, %216 : vector<8x128xf32>
    %219 = math.tanh %218 : vector<8x128xf32>
    %cst_90 = arith.constant 5.000000e-01 : f32
    %220 = vector.broadcast %cst_90 : f32 to vector<8x128xf32>
    %221 = arith.mulf %220, %219 : vector<8x128xf32>
    %cst_91 = arith.constant 5.000000e-01 : f32
    %222 = vector.broadcast %cst_91 : f32 to vector<8x128xf32>
    %223 = arith.addf %221, %222 : vector<8x128xf32>
    %224 = vector.extract_strided_slice %215 {offsets = [0, 128], sizes = [8, 128], strides = [1, 1]} : vector<8x512xf32> to vector<8x128xf32>
    %cst_92 = arith.constant 5.000000e-01 : f32
    %225 = vector.broadcast %cst_92 : f32 to vector<8x128xf32>
    %226 = arith.mulf %225, %224 : vector<8x128xf32>
    %227 = math.tanh %226 : vector<8x128xf32>
    %cst_93 = arith.constant 5.000000e-01 : f32
    %228 = vector.broadcast %cst_93 : f32 to vector<8x128xf32>
    %229 = arith.mulf %228, %227 : vector<8x128xf32>
    %cst_94 = arith.constant 5.000000e-01 : f32
    %230 = vector.broadcast %cst_94 : f32 to vector<8x128xf32>
    %231 = arith.addf %229, %230 : vector<8x128xf32>
    %232 = vector.extract_strided_slice %215 {offsets = [0, 256], sizes = [8, 128], strides = [1, 1]} : vector<8x512xf32> to vector<8x128xf32>
    %233 = math.tanh %232 : vector<8x128xf32>
    %234 = vector.extract_strided_slice %215 {offsets = [0, 384], sizes = [8, 128], strides = [1, 1]} : vector<8x512xf32> to vector<8x128xf32>
    %cst_95 = arith.constant 5.000000e-01 : f32
    %235 = vector.broadcast %cst_95 : f32 to vector<8x128xf32>
    %236 = arith.mulf %235, %234 : vector<8x128xf32>
    %237 = math.tanh %236 : vector<8x128xf32>
    %cst_96 = arith.constant 5.000000e-01 : f32
    %238 = vector.broadcast %cst_96 : f32 to vector<8x128xf32>
    %239 = arith.mulf %238, %237 : vector<8x128xf32>
    %cst_97 = arith.constant 5.000000e-01 : f32
    %240 = vector.broadcast %cst_97 : f32 to vector<8x128xf32>
    %241 = arith.addf %239, %240 : vector<8x128xf32>
    %242 = arith.mulf %231, %203 : vector<8x128xf32>
    %243 = arith.mulf %223, %233 : vector<8x128xf32>
    %244 = arith.addf %242, %243 : vector<8x128xf32>
    %245 = math.tanh %244 : vector<8x128xf32>
    %246 = arith.mulf %241, %245 : vector<8x128xf32>
    %247 = arith.index_cast %c5_i32 : i32 to index
    %c0_98 = arith.constant 0 : index
    %c0_99 = arith.constant 0 : index
    %248 = vector.load %arg4[%247, %c0_98, %c0_99] : memref<8x8x128xf32, #tpu.memory_space<vmem>>, vector<1x8x128xf32>
    %249 = vector.shape_cast %248 : vector<1x8x128xf32> to vector<8x128xf32>
    %250 = vector.shape_cast %246 : vector<8x128xf32> to vector<1x8x128xf32>
    tpu.vector_store %arg4[%247, %c0_98, %c0_99], %250 {strides = array<i32>} : memref<8x8x128xf32, #tpu.memory_space<vmem>>, vector<1x8x128xf32>,
    %c6_i32 = arith.constant 6 : i32
    %251 = arith.index_cast %c6_i32 : i32 to index
    %c0_100 = arith.constant 0 : index
    %c0_101 = arith.constant 0 : index
    %252 = vector.load %arg2[%251, %c0_100, %c0_101] : memref<8x8x512xf32, #tpu.memory_space<vmem>>, vector<1x8x512xf32>
    %253 = vector.shape_cast %252 : vector<1x8x512xf32> to vector<8x512xf32>
    %c0_102 = arith.constant 0 : index
    %c0_103 = arith.constant 0 : index
    %254 = vector.load %arg7[%c0_102, %c0_103] : memref<128x512xf32, #tpu.memory_space<vmem>>, vector<128x512xf32>
    %cst_104 = arith.constant dense<0.000000e+00> : vector<8x512xf32>
    %255 = tpu.matmul %246, %254, %cst_104 {dimension_numbers = #tpu.dot_dimension_numbers<[1], [0], [0], [1], [0, 0, 1, 1], [], []>} : vector<8x128xf32>, vector<128x512xf32>, vector<8x512xf32> -> vector<8x512xf32>
    %256 = arith.addf %253, %255 : vector<8x512xf32>
    %257 = vector.extract_strided_slice %256 {offsets = [0, 0], sizes = [8, 128], strides = [1, 1]} : vector<8x512xf32> to vector<8x128xf32>
    %cst_105 = arith.constant 5.000000e-01 : f32
    %258 = vector.broadcast %cst_105 : f32 to vector<8x128xf32>
    %259 = arith.mulf %258, %257 : vector<8x128xf32>
    %260 = math.tanh %259 : vector<8x128xf32>
    %cst_106 = arith.constant 5.000000e-01 : f32
    %261 = vector.broadcast %cst_106 : f32 to vector<8x128xf32>
    %262 = arith.mulf %261, %260 : vector<8x128xf32>
    %cst_107 = arith.constant 5.000000e-01 : f32
    %263 = vector.broadcast %cst_107 : f32 to vector<8x128xf32>
    %264 = arith.addf %262, %263 : vector<8x128xf32>
    %265 = vector.extract_strided_slice %256 {offsets = [0, 128], sizes = [8, 128], strides = [1, 1]} : vector<8x512xf32> to vector<8x128xf32>
    %cst_108 = arith.constant 5.000000e-01 : f32
    %266 = vector.broadcast %cst_108 : f32 to vector<8x128xf32>
    %267 = arith.mulf %266, %265 : vector<8x128xf32>
    %268 = math.tanh %267 : vector<8x128xf32>
    %cst_109 = arith.constant 5.000000e-01 : f32
    %269 = vector.broadcast %cst_109 : f32 to vector<8x128xf32>
    %270 = arith.mulf %269, %268 : vector<8x128xf32>
    %cst_110 = arith.constant 5.000000e-01 : f32
    %271 = vector.broadcast %cst_110 : f32 to vector<8x128xf32>
    %272 = arith.addf %270, %271 : vector<8x128xf32>
    %273 = vector.extract_strided_slice %256 {offsets = [0, 256], sizes = [8, 128], strides = [1, 1]} : vector<8x512xf32> to vector<8x128xf32>
    %274 = math.tanh %273 : vector<8x128xf32>
    %275 = vector.extract_strided_slice %256 {offsets = [0, 384], sizes = [8, 128], strides = [1, 1]} : vector<8x512xf32> to vector<8x128xf32>
    %cst_111 = arith.constant 5.000000e-01 : f32
    %276 = vector.broadcast %cst_111 : f32 to vector<8x128xf32>
    %277 = arith.mulf %276, %275 : vector<8x128xf32>
    %278 = math.tanh %277 : vector<8x128xf32>
    %cst_112 = arith.constant 5.000000e-01 : f32
    %279 = vector.broadcast %cst_112 : f32 to vector<8x128xf32>
    %280 = arith.mulf %279, %278 : vector<8x128xf32>
    %cst_113 = arith.constant 5.000000e-01 : f32
    %281 = vector.broadcast %cst_113 : f32 to vector<8x128xf32>
    %282 = arith.addf %280, %281 : vector<8x128xf32>
    %283 = arith.mulf %272, %244 : vector<8x128xf32>
    %284 = arith.mulf %264, %274 : vector<8x128xf32>
    %285 = arith.addf %283, %284 : vector<8x128xf32>
    %286 = math.tanh %285 : vector<8x128xf32>
    %287 = arith.mulf %282, %286 : vector<8x128xf32>
    %288 = arith.index_cast %c6_i32 : i32 to index
    %c0_114 = arith.constant 0 : index
    %c0_115 = arith.constant 0 : index
    %289 = vector.load %arg4[%288, %c0_114, %c0_115] : memref<8x8x128xf32, #tpu.memory_space<vmem>>, vector<1x8x128xf32>
    %290 = vector.shape_cast %289 : vector<1x8x128xf32> to vector<8x128xf32>
    %291 = vector.shape_cast %287 : vector<8x128xf32> to vector<1x8x128xf32>
    tpu.vector_store %arg4[%288, %c0_114, %c0_115], %291 {strides = array<i32>} : memref<8x8x128xf32, #tpu.memory_space<vmem>>, vector<1x8x128xf32>,
    %c7_i32 = arith.constant 7 : i32
    %292 = arith.index_cast %c7_i32 : i32 to index
    %c0_116 = arith.constant 0 : index
    %c0_117 = arith.constant 0 : index
    %293 = vector.load %arg2[%292, %c0_116, %c0_117] : memref<8x8x512xf32, #tpu.memory_space<vmem>>, vector<1x8x512xf32>
    %294 = vector.shape_cast %293 : vector<1x8x512xf32> to vector<8x512xf32>
    %c0_118 = arith.constant 0 : index
    %c0_119 = arith.constant 0 : index
    %295 = vector.load %arg7[%c0_118, %c0_119] : memref<128x512xf32, #tpu.memory_space<vmem>>, vector<128x512xf32>
    %cst_120 = arith.constant dense<0.000000e+00> : vector<8x512xf32>
    %296 = tpu.matmul %287, %295, %cst_120 {dimension_numbers = #tpu.dot_dimension_numbers<[1], [0], [0], [1], [0, 0, 1, 1], [], []>} : vector<8x128xf32>, vector<128x512xf32>, vector<8x512xf32> -> vector<8x512xf32>
    %297 = arith.addf %294, %296 : vector<8x512xf32>
    %298 = vector.extract_strided_slice %297 {offsets = [0, 0], sizes = [8, 128], strides = [1, 1]} : vector<8x512xf32> to vector<8x128xf32>
    %cst_121 = arith.constant 5.000000e-01 : f32
    %299 = vector.broadcast %cst_121 : f32 to vector<8x128xf32>
    %300 = arith.mulf %299, %298 : vector<8x128xf32>
    %301 = math.tanh %300 : vector<8x128xf32>
    %cst_122 = arith.constant 5.000000e-01 : f32
    %302 = vector.broadcast %cst_122 : f32 to vector<8x128xf32>
    %303 = arith.mulf %302, %301 : vector<8x128xf32>
    %cst_123 = arith.constant 5.000000e-01 : f32
    %304 = vector.broadcast %cst_123 : f32 to vector<8x128xf32>
    %305 = arith.addf %303, %304 : vector<8x128xf32>
    %306 = vector.extract_strided_slice %297 {offsets = [0, 128], sizes = [8, 128], strides = [1, 1]} : vector<8x512xf32> to vector<8x128xf32>
    %cst_124 = arith.constant 5.000000e-01 : f32
    %307 = vector.broadcast %cst_124 : f32 to vector<8x128xf32>
    %308 = arith.mulf %307, %306 : vector<8x128xf32>
    %309 = math.tanh %308 : vector<8x128xf32>
    %cst_125 = arith.constant 5.000000e-01 : f32
    %310 = vector.broadcast %cst_125 : f32 to vector<8x128xf32>
    %311 = arith.mulf %310, %309 : vector<8x128xf32>
    %cst_126 = arith.constant 5.000000e-01 : f32
    %312 = vector.broadcast %cst_126 : f32 to vector<8x128xf32>
    %313 = arith.addf %311, %312 : vector<8x128xf32>
    %314 = vector.extract_strided_slice %297 {offsets = [0, 256], sizes = [8, 128], strides = [1, 1]} : vector<8x512xf32> to vector<8x128xf32>
    %315 = math.tanh %314 : vector<8x128xf32>
    %316 = vector.extract_strided_slice %297 {offsets = [0, 384], sizes = [8, 128], strides = [1, 1]} : vector<8x512xf32> to vector<8x128xf32>
    %cst_127 = arith.constant 5.000000e-01 : f32
    %317 = vector.broadcast %cst_127 : f32 to vector<8x128xf32>
    %318 = arith.mulf %317, %316 : vector<8x128xf32>
    %319 = math.tanh %318 : vector<8x128xf32>
    %cst_128 = arith.constant 5.000000e-01 : f32
    %320 = vector.broadcast %cst_128 : f32 to vector<8x128xf32>
    %321 = arith.mulf %320, %319 : vector<8x128xf32>
    %cst_129 = arith.constant 5.000000e-01 : f32
    %322 = vector.broadcast %cst_129 : f32 to vector<8x128xf32>
    %323 = arith.addf %321, %322 : vector<8x128xf32>
    %324 = arith.mulf %313, %285 : vector<8x128xf32>
    %325 = arith.mulf %305, %315 : vector<8x128xf32>
    %326 = arith.addf %324, %325 : vector<8x128xf32>
    %327 = math.tanh %326 : vector<8x128xf32>
    %328 = arith.mulf %323, %327 : vector<8x128xf32>
    %329 = arith.index_cast %c7_i32 : i32 to index
    %c0_130 = arith.constant 0 : index
    %c0_131 = arith.constant 0 : index
    %330 = vector.load %arg4[%329, %c0_130, %c0_131] : memref<8x8x128xf32, #tpu.memory_space<vmem>>, vector<1x8x128xf32>
    %331 = vector.shape_cast %330 : vector<1x8x128xf32> to vector<8x128xf32>
    %332 = vector.shape_cast %328 : vector<8x128xf32> to vector<1x8x128xf32>
    tpu.vector_store %arg4[%329, %c0_130, %c0_131], %332 {strides = array<i32>} : memref<8x8x128xf32, #tpu.memory_space<vmem>>, vector<1x8x128xf32>,
    %c8_i32 = arith.constant 8 : i32
    %c0_132 = arith.constant 0 : index
    %c0_133 = arith.constant 0 : index
    %333 = vector.load %arg9[%c0_132, %c0_133] : memref<8x128xf32, #tpu.memory_space<vmem>>, vector<8x128xf32>
    tpu.vector_store %arg9[%c0_132, %c0_133], %328 {strides = array<i32>} : memref<8x128xf32, #tpu.memory_space<vmem>>, vector<8x128xf32>,
    %c0_134 = arith.constant 0 : index
    %c0_135 = arith.constant 0 : index
    %334 = vector.load %arg10[%c0_134, %c0_135] : memref<8x128xf32, #tpu.memory_space<vmem>>, vector<8x128xf32>
    tpu.vector_store %arg10[%c0_134, %c0_135], %326 {strides = array<i32>} : memref<8x128xf32, #tpu.memory_space<vmem>>, vector<8x128xf32>,
    %c0_i32_136 = arith.constant 0 : i32
    %335 = arith.cmpi eq, %arg1, %c0_i32_136 : i32
    %336 = arith.extui %335 : i1 to i32
    %c0_i32_137 = arith.constant 0 : i32
    %337 = arith.cmpi ne, %336, %c0_i32_137 : i32
    scf.if %337 {
      %c0_138 = arith.constant 0 : index
      %c0_139 = arith.constant 0 : index
      %338 = vector.load %arg5[%c0_138, %c0_139] : memref<8x128xf32, #tpu.memory_space<vmem>>, vector<8x128xf32>
      tpu.vector_store %arg5[%c0_138, %c0_139], %328 {strides = array<i32>} : memref<8x128xf32, #tpu.memory_space<vmem>>, vector<8x128xf32>,
      %c0_140 = arith.constant 0 : index
      %c0_141 = arith.constant 0 : index
      %339 = vector.load %arg6[%c0_140, %c0_141] : memref<8x128xf32, #tpu.memory_space<vmem>>, vector<8x128xf32>
      tpu.vector_store %arg6[%c0_140, %c0_141], %326 {strides = array<i32>} : memref<8x128xf32, #tpu.memory_space<vmem>>, vector<8x128xf32>,
    } else {
    }
    return
  }
  func.func @transform_0(%arg0: i32, %arg1: i32) -> (i32, i32, i32) {
    %c0_i32 = arith.constant 0 : i32
    %c0_i32_0 = arith.constant 0 : i32
    return %arg1, %arg0, %c0_i32 : i32, i32, i32
  }
  func.func @transform_2(%arg0: i32, %arg1: i32) -> (i32, i32, i32) {
    %c0_i32 = arith.constant 0 : i32
    %c0_i32_0 = arith.constant 0 : i32
    return %arg1, %arg0, %c0_i32 : i32, i32, i32
  }
  func.func @transform_3(%arg0: i32, %arg1: i32) -> (i32, i32) {
    %c0_i32 = arith.constant 0 : i32
    %c0_i32_0 = arith.constant 0 : i32
    return %arg0, %c0_i32 : i32, i32
  }
  func.func @transform_4(%arg0: i32, %arg1: i32) -> (i32, i32) {
    %c0_i32 = arith.constant 0 : i32
    %c0_i32_0 = arith.constant 0 : i32
    return %arg0, %c0_i32 : i32, i32
  }
}

</mosaic_0001>

<llo_original>
// kernel: tpu_custom_call.1
$region0: #{tpu_custom_call.1}
  #allocation0 [shape = 'u32[]', space=smem, size = 0x4, offset = 0x4, fixed_abs, tag = 'smem constant byte address 0x4 - core index']
  #allocation1 [shape = 'u32[144,128]{1,0:T(1,128)}', space=vmem, size = 0x12000, scoped, tag = 'internal scratch']
  #allocation2 [shape = 'f32[128,512]{1,0:T(8,128)}', space=vmem, size = 0x40000, scoped, tag = 'scratch operand']
  #allocation3 [shape = 's32[1]{0}', space=sflag, size = 0x4, scoped, tag = 'scratch operand']
  #allocation4 [shape = 'f32[8,128]{1,0:T(8,128)}', space=vmem, size = 0x1000, scoped, tag = 'scratch operand']
  #allocation5 [shape = 'f32[8,128]{1,0:T(8,128)}', space=vmem, size = 0x1000, scoped, tag = 'scratch operand']
  #allocation13 [shape = 's32[]', space=sflag, size = 0x4, offset = 0, fixed_abs, tag = 'sflag constant byte address 0x0 - dummy sync flag']
  #allocation14 [shape = 's32[]', space=sflag, size = 0x4, offset = 0, fixed_abs, tag = 'sflag constant byte address 0x0 - dummy sync flag']
  #allocation15 [shape = 'u32[]', space=smem, size = 0x4, offset = 0x44, fixed_abs, tag = 'smem constant byte address 0x44 - assertion arg 0']
  #allocation16 [shape = 'u32[]', space=smem, size = 0x4, offset = 0x48, fixed_abs, tag = 'smem constant byte address 0x48 - assertion arg 1']
  %s0 = inlined_call_operand.hbm [shape: f32[8,8,512], index: 0, kind: input, shape index: {}]
  %s1 = inlined_call_operand.hbm [shape: f32[128,512], index: 1, kind: input, shape index: {}]
  %s2 = inlined_call_operand.hbm [shape: f32[8,8,128], index: 2, kind: output, shape index: {0}]
  %s3 = inlined_call_operand.hbm [shape: f32[8,128], index: 3, kind: output, shape index: {1}]
  %s4 = inlined_call_operand.hbm [shape: f32[8,128], index: 4, kind: output, shape index: {2}]
  %5 = xla_tuple %s2, %s3, %s4
  %s6 = sld [smem:[#allocation0]]
  $region46: #{tpu_custom_call.1} parent=0
    _
  %s8 = ssub.s32 1, %s6
  %s9 = scalar_select 0, %s8, %s6
  $region1: #{tpu_custom_call.1} parent=0
    #allocation6 [shape = 'u8[131072]{0}', space=vmem, size = 0x20000, scoped, tag = 'input window, operand 0, single buffered']
    #allocation7 [shape = 's32[1]{0}', space=sflag, size = 0x4, scoped, tag = 'scoped memory for tpu_custom_call.1']
    #allocation8 [shape = 's32[1]{0}', space=sflag, size = 0x4, scoped, tag = 'scoped memory for tpu_custom_call.1']
    #allocation9 [shape = 'u8[32768]{0}', space=vmem, size = 0x8000, scoped, tag = 'output window, operand 0, single buffered']
    #allocation10 [shape = 'u8[4096]{0}', space=vmem, size = 0x1000, scoped, tag = 'output window, operand 1, single buffered']
    #allocation11 [shape = 's32[1]{0}', space=sflag, size = 0x4, scoped, tag = 'scoped memory for tpu_custom_call.1']
    #allocation12 [shape = 'u8[4096]{0}', space=vmem, size = 0x1000, scoped, tag = 'output window, operand 2, single buffered']
    %10 = vsyncpa [#allocation7], 0
    %11 = vsyncpa [#allocation8], 0
    %12 = vsyncpa [#allocation11], 0
    // Predicated region
    $region2: #{tpu_custom_call.1} parent=1 // pred_check
      _
    $region3: #{tpu_custom_call.1} parent=1 // pred_check_branch
      %14 = sbr.rel (0) target = $region5
    $region4: #{tpu_custom_call.1} parent=1 // pred_region
      %s16 = ssub.s32 4096, 4096
      %17 = vsyncadd [#allocation7], %s16
      %s18 = sshll.u32 [#allocation6], 4
      %s19 = int_to_ptr.vmem [resolvable:$true] %s18
      %24 = dma.hbm_to_vmem [thread:$0]  %s0, 4096, %s19, [#allocation7], 512, 512, 32
    $region5: #{tpu_custom_call.1} parent=1 // pred_fallthru
      _
    // Predicated region
    $region6: #{tpu_custom_call.1} parent=1 // pred_check
      _
    $region7: #{tpu_custom_call.1} parent=1 // pred_check_branch
      %26 = sbr.rel (0) target = $region9
    $region8: #{tpu_custom_call.1} parent=1 // pred_region
      %27 = dma.done [#allocation7], 4096
    $region9: #{tpu_custom_call.1} parent=1 // pred_fallthru
      _
    %p28 = scmp.eq.s32.totalorder 0, 0
    // Predicated region
    $region10: #{tpu_custom_call.1} parent=1 // pred_check
      %p29 = pneg %p28
    $region11: #{tpu_custom_call.1} parent=1 // pred_check_branch
      %31 = sbr.rel (%p29) target = $region13
    $region12: #{tpu_custom_call.1} parent=1 // pred_region
      // Predicated region
      $region14: #{tpu_custom_call.1} parent=12 // pred_check
        _
      $region15: #{tpu_custom_call.1} parent=12 // pred_check_branch
        %33 = sbr.rel target = $region17
      $region16: #{tpu_custom_call.1} parent=12 // pred_region
        %34 = sst [smem:[#allocation15]] [#allocation14]
        %35 = sst [smem:[#allocation16]] [#allocation13]
      $region17: #{tpu_custom_call.1} parent=12 // pred_fallthru
        _
      %37 = shalt.err (0)
      %s39 = sshll.u32 [#allocation2], 4
      %s40 = int_to_ptr.vmem [resolvable:$true] %s39
      %42 = dma.hbm_to_vmem [thread:$0]  %s1, 8192, %s40, [#allocation3]
      %s43 = smul.u32 8, 16
      %s44 = smul.u32 %s43, 4
      %s45 = sshll.u32 %s44, 4
      %46 = dma.done [#allocation3], %s45
      %47 = vst [vmem:[#allocation4] sm:$0xff] 0.0
      %48 = vst [vmem:[#allocation5] sm:$0xff] 0.0
    $region13: #{tpu_custom_call.1} parent=1 // pred_fallthru
      _
    %v49 = vld [vmem:[#allocation4] sm:$0xff]
    %v50 = vld [vmem:[#allocation5] sm:$0xff]
    %v51 = vld [vmem:[#allocation6] sm:$0xff]
    %v52 = vld [vmem:[#allocation6 + $0x8] sm:$0xff]
    %v53 = vld [vmem:[#allocation6 + $0x10] sm:$0xff]
    %v54 = vld [vmem:[#allocation6 + $0x18] sm:$0xff]
    %v55 = vld [vmem:[#allocation2] sm:$0xff]
    %v56 = vld [vmem:[#allocation2 + $0x8] sm:$0xff]
    %v57 = vld [vmem:[#allocation2 + $0x10] sm:$0xff]
    %v58 = vld [vmem:[#allocation2 + $0x18] sm:$0xff]
    %v59 = vld [vmem:[#allocation2 + $0x20] sm:$0xff]
    %v60 = vld [vmem:[#allocation2 + $0x28] sm:$0xff]
    %v61 = vld [vmem:[#allocation2 + $0x30] sm:$0xff]
    %v62 = vld [vmem:[#allocation2 + $0x38] sm:$0xff]
    %v63 = vld [vmem:[#allocation2 + $0x40] sm:$0xff]
    %v64 = vld [vmem:[#allocation2 + $0x48] sm:$0xff]
    %v65 = vld [vmem:[#allocation2 + $0x50] sm:$0xff]
    %v66 = vld [vmem:[#allocation2 + $0x58] sm:$0xff]
    %v67 = vld [vmem:[#allocation2 + $0x60] sm:$0xff]
    %v68 = vld [vmem:[#allocation2 + $0x68] sm:$0xff]
    %v69 = vld [vmem:[#allocation2 + $0x70] sm:$0xff]
    %v70 = vld [vmem:[#allocation2 + $0x78] sm:$0xff]
    %v71 = vld [vmem:[#allocation2 + $0x80] sm:$0xff]
    %v72 = vld [vmem:[#allocation2 + $0x88] sm:$0xff]
    %v73 = vld [vmem:[#allocation2 + $0x90] sm:$0xff]
    %v74 = vld [vmem:[#allocation2 + $0x98] sm:$0xff]
    %v75 = vld [vmem:[#allocation2 + $0xa0] sm:$0xff]
    %v76 = vld [vmem:[#allocation2 + $0xa8] sm:$0xff]
    %v77 = vld [vmem:[#allocation2 + $0xb0] sm:$0xff]
    %v78 = vld [vmem:[#allocation2 + $0xb8] sm:$0xff]
    %v79 = vld [vmem:[#allocation2 + $0xc0] sm:$0xff]
    %v80 = vld [vmem:[#allocation2 + $0xc8] sm:$0xff]
    %v81 = vld [vmem:[#allocation2 + $0xd0] sm:$0xff]
    %v82 = vld [vmem:[#allocation2 + $0xd8] sm:$0xff]
    %v83 = vld [vmem:[#allocation2 + $0xe0] sm:$0xff]
    %v84 = vld [vmem:[#allocation2 + $0xe8] sm:$0xff]
    %v85 = vld [vmem:[#allocation2 + $0xf0] sm:$0xff]
    %v86 = vld [vmem:[#allocation2 + $0xf8] sm:$0xff]
    %v87 = vld [vmem:[#allocation2 + $0x100] sm:$0xff]
    %v88 = vld [vmem:[#allocation2 + $0x108] sm:$0xff]
    %v89 = vld [vmem:[#allocation2 + $0x110] sm:$0xff]
    %v90 = vld [vmem:[#allocation2 + $0x118] sm:$0xff]
    %v91 = vld [vmem:[#allocation2 + $0x120] sm:$0xff]
    %v92 = vld [vmem:[#allocation2 + $0x128] sm:$0xff]
    %v93 = vld [vmem:[#allocation2 + $0x130] sm:$0xff]
    %v94 = vld [vmem:[#allocation2 + $0x138] sm:$0xff]
    %v95 = vld [vmem:[#allocation2 + $0x140] sm:$0xff]
    %v96 = vld [vmem:[#allocation2 + $0x148] sm:$0xff]
    %v97 = vld [vmem:[#allocation2 + $0x150] sm:$0xff]
    %v98 = vld [vmem:[#allocation2 + $0x158] sm:$0xff]
    %v99 = vld [vmem:[#allocation2 + $0x160] sm:$0xff]
    %v100 = vld [vmem:[#allocation2 + $0x168] sm:$0xff]
    %v101 = vld [vmem:[#allocation2 + $0x170] sm:$0xff]
    %v102 = vld [vmem:[#allocation2 + $0x178] sm:$0xff]
    %v103 = vld [vmem:[#allocation2 + $0x180] sm:$0xff]
    %v104 = vld [vmem:[#allocation2 + $0x188] sm:$0xff]
    %v105 = vld [vmem:[#allocation2 + $0x190] sm:$0xff]
    %v106 = vld [vmem:[#allocation2 + $0x198] sm:$0xff]
    %v107 = vld [vmem:[#allocation2 + $0x1a0] sm:$0xff]
    %v108 = vld [vmem:[#allocation2 + $0x1a8] sm:$0xff]
    %v109 = vld [vmem:[#allocation2 + $0x1b0] sm:$0xff]
    %v110 = vld [vmem:[#allocation2 + $0x1b8] sm:$0xff]
    %v111 = vld [vmem:[#allocation2 + $0x1c0] sm:$0xff]
    %v112 = vld [vmem:[#allocation2 + $0x1c8] sm:$0xff]
    %v113 = vld [vmem:[#allocation2 + $0x1d0] sm:$0xff]
    %v114 = vld [vmem:[#allocation2 + $0x1d8] sm:$0xff]
    %v115 = vld [vmem:[#allocation2 + $0x1e0] sm:$0xff]
    %v116 = vld [vmem:[#allocation2 + $0x1e8] sm:$0xff]
    %v117 = vld [vmem:[#allocation2 + $0x1f0] sm:$0xff]
    %v118 = vld [vmem:[#allocation2 + $0x1f8] sm:$0xff]
    %119 = vmatprep.subr.mxu0 %v116
    %120 = vmatpush1.msra.mxu0 %v115
    %121 = vmatprep.subr.mxu0 %v112
    %122 = vmatpush1.msra.mxu0 %v111
    %123 = vmatprep.subr.mxu0 %v108
    %124 = vmatpush1.msra.mxu0 %v107
    %125 = vmatprep.subr.mxu0 %v104
    %126 = vmatpush1.msra.mxu0 %v103
    %127 = vmatprep.subr.mxu0 %v100
    %128 = vmatpush1.msra.mxu0 %v99
    %129 = vmatprep.subr.mxu0 %v96
    %130 = vmatpush1.msra.mxu0 %v95
    %131 = vmatprep.subr.mxu0 %v92
    %132 = vmatpush1.msra.mxu0 %v91
    %133 = vmatprep.subr.mxu0 %v88
    %134 = vmatpush1.msra.mxu0 %v87
    %135 = vmatprep.subr.mxu0 %v84
    %136 = vmatpush1.msra.mxu0 %v83
    %137 = vmatprep.subr.mxu0 %v80
    %138 = vmatpush1.msra.mxu0 %v79
    %139 = vmatprep.subr.mxu0 %v76
    %140 = vmatpush1.msra.mxu0 %v75
    %141 = vmatprep.subr.mxu0 %v72
    %142 = vmatpush1.msra.mxu0 %v71
    %143 = vmatprep.subr.mxu0 %v68
    %144 = vmatpush1.msra.mxu0 %v67
    %145 = vmatprep.subr.mxu0 %v64
    %146 = vmatpush1.msra.mxu0 %v63
    %147 = vmatprep.subr.mxu0 %v60
    %148 = vmatpush1.msra.mxu0 %v59
    %149 = vmatprep.subr.mxu0 %v56
    %150 = vmatpush1.msra.mxu0 %v55
    %151 = vmatprep.subr.mxu0 0.0
    %152 = vmatpush2.msra.mxu0 0.0
    %153 = vmatprep.subr.mxu0 0.0
    %154 = vmatpush2.msra.mxu0 0.0
    %155 = vmatprep.subr.mxu0 0.0
    %156 = vmatpush2.msra.mxu0 0.0
    %157 = vmatprep.subr.mxu0 0.0
    %158 = vmatpush2.msra.mxu0 0.0
    %159 = vmatprep.subr.mxu0 0.0
    %160 = vmatpush2.msra.mxu0 0.0
    %161 = vmatprep.subr.mxu0 0.0
    %162 = vmatpush2.msra.mxu0 0.0
    %163 = vmatprep.subr.mxu0 0.0
    %164 = vmatpush2.msra.mxu0 0.0
    %165 = vmatprep.subr.mxu0 0.0
    %166 = vmatpush2.msra.mxu0 0.0
    %167 = vmatprep.subr.mxu0 0.0
    %168 = vmatpush2.msra.mxu0 0.0
    %169 = vmatprep.subr.mxu0 0.0
    %170 = vmatpush2.msra.mxu0 0.0
    %171 = vmatprep.subr.mxu0 0.0
    %172 = vmatpush2.msra.mxu0 0.0
    %173 = vmatprep.subr.mxu0 0.0
    %174 = vmatpush2.msra.mxu0 0.0
    %175 = vmatprep.subr.mxu0 0.0
    %176 = vmatpush2.msra.mxu0 0.0
    %177 = vmatprep.subr.mxu0 0.0
    %178 = vmatpush2.msra.mxu0 0.0
    %179 = vmatprep.subr.mxu0 0.0
    %180 = vmatpush2.msra.mxu0 0.0
    %181 = vmatprep.subr.mxu0 0.0
    %182 = vmatpush2.msra.mxu0 0.0
    %183 = vmatprep.mubr.f32.mxu0 0.0
    %184 = vmatmul.mubr.f32.gmra.mxu0 %v49
    %v185 = vpop.f32.mrf.mxu0
    %v186 = vadd.f32 0.0, %v185
    %v187 = vpop.f32.mrf.mxu0
    %v188 = vadd.f32 0.0, %v187
    %189 = vdwg.mxu0
    %190 = vmatprep.subr.mxu0 %v118
    %191 = vmatpush1.msra.mxu0 %v117
    %192 = vmatprep.subr.mxu0 %v114
    %193 = vmatpush1.msra.mxu0 %v113
    %194 = vmatprep.subr.mxu0 %v110
    %195 = vmatpush1.msra.mxu0 %v109
    %196 = vmatprep.subr.mxu0 %v106
    %197 = vmatpush1.msra.mxu0 %v105
    %198 = vmatprep.subr.mxu0 %v102
    %199 = vmatpush1.msra.mxu0 %v101
    %200 = vmatprep.subr.mxu0 %v98
    %201 = vmatpush1.msra.mxu0 %v97
    %202 = vmatprep.subr.mxu0 %v94
    %203 = vmatpush1.msra.mxu0 %v93
    %204 = vmatprep.subr.mxu0 %v90
    %205 = vmatpush1.msra.mxu0 %v89
    %206 = vmatprep.subr.mxu0 %v86
    %207 = vmatpush1.msra.mxu0 %v85
    %208 = vmatprep.subr.mxu0 %v82
    %209 = vmatpush1.msra.mxu0 %v81
    %210 = vmatprep.subr.mxu0 %v78
    %211 = vmatpush1.msra.mxu0 %v77
    %212 = vmatprep.subr.mxu0 %v74
    %213 = vmatpush1.msra.mxu0 %v73
    %214 = vmatprep.subr.mxu0 %v70
    %215 = vmatpush1.msra.mxu0 %v69
    %216 = vmatprep.subr.mxu0 %v66
    %217 = vmatpush1.msra.mxu0 %v65
    %218 = vmatprep.subr.mxu0 %v62
    %219 = vmatpush1.msra.mxu0 %v61
    %220 = vmatprep.subr.mxu0 %v58
    %221 = vmatpush1.msra.mxu0 %v57
    %222 = vmatprep.subr.mxu0 0.0
    %223 = vmatpush2.msra.mxu0 0.0
    %224 = vmatprep.subr.mxu0 0.0
    %225 = vmatpush2.msra.mxu0 0.0
    %226 = vmatprep.subr.mxu0 0.0
    %227 = vmatpush2.msra.mxu0 0.0
    %228 = vmatprep.subr.mxu0 0.0
    %229 = vmatpush2.msra.mxu0 0.0
    %230 = vmatprep.subr.mxu0 0.0
    %231 = vmatpush2.msra.mxu0 0.0
    %232 = vmatprep.subr.mxu0 0.0
    %233 = vmatpush2.msra.mxu0 0.0
    %234 = vmatprep.subr.mxu0 0.0
    %235 = vmatpush2.msra.mxu0 0.0
    %236 = vmatprep.subr.mxu0 0.0
    %237 = vmatpush2.msra.mxu0 0.0
    %238 = vmatprep.subr.mxu0 0.0
    %239 = vmatpush2.msra.mxu0 0.0
    %240 = vmatprep.subr.mxu0 0.0
    %241 = vmatpush2.msra.mxu0 0.0
    %242 = vmatprep.subr.mxu0 0.0
    %243 = vmatpush2.msra.mxu0 0.0
    %244 = vmatprep.subr.mxu0 0.0
    %245 = vmatpush2.msra.mxu0 0.0
    %246 = vmatprep.subr.mxu0 0.0
    %247 = vmatpush2.msra.mxu0 0.0
    %248 = vmatprep.subr.mxu0 0.0
    %249 = vmatpush2.msra.mxu0 0.0
    %250 = vmatprep.subr.mxu0 0.0
    %251 = vmatpush2.msra.mxu0 0.0
    %252 = vmatprep.subr.mxu0 0.0
    %253 = vmatpush2.msra.mxu0 0.0
    %254 = vmatprep.mubr.f32.mxu0 0.0
    %255 = vmatmul.mubr.f32.gmra.mxu0 %v49
    %v256 = vpop.f32.mrf.mxu0
    %v257 = vadd.f32 0.0, %v256
    %v258 = vpop.f32.mrf.mxu0
    %v259 = vadd.f32 0.0, %v258
    %260 = vdwg.mxu0
    %v261 = vadd.f32 %v51, %v186
    %v262 = vadd.f32 %v52, %v188
    %v263 = vadd.f32 %v53, %v257
    %v264 = vadd.f32 %v54, %v259
    %v265 = vmul.f32 %v261, 0.5
    %v266 = vtanh.pop %v265
    %v267 = vmul.f32 %v266, 0.5
    %v268 = vadd.f32 %v267, 0.5
    %v269 = vmul.f32 %v262, 0.5
    %v270 = vtanh.pop %v269
    %v271 = vmul.f32 %v270, 0.5
    %v272 = vadd.f32 %v271, 0.5
    %v273 = vtanh.pop %v263
    %v274 = vmul.f32 %v264, 0.5
    %v275 = vtanh.pop %v274
    %v276 = vmul.f32 %v275, 0.5
    %v277 = vadd.f32 %v276, 0.5
    %v278 = vmul.f32 %v272, %v50
    %v279 = vmul.f32 %v268, %v273
    %v280 = vadd.f32 %v278, %v279
    %v281 = vtanh.pop %v280
    %v282 = vmul.f32 %v277, %v281
    %283 = vst [vmem:[#allocation9] sm:$0xff] %v282
    %s284 = scalar_lea.vmem [#allocation6], 32
    %v285 = vld [vmem:[%s284] sm:$0xff]
    %v286 = vld [vmem:[%s284 + $0x8] sm:$0xff]
    %v287 = vld [vmem:[%s284 + $0x10] sm:$0xff]
    %v288 = vld [vmem:[%s284 + $0x18] sm:$0xff]
    %v289 = vld [vmem:[#allocation2] sm:$0xff]
    %v290 = vld [vmem:[#allocation2 + $0x8] sm:$0xff]
    %v291 = vld [vmem:[#allocation2 + $0x10] sm:$0xff]
    %v292 = vld [vmem:[#allocation2 + $0x18] sm:$0xff]
    %v293 = vld [vmem:[#allocation2 + $0x20] sm:$0xff]
    %v294 = vld [vmem:[#allocation2 + $0x28] sm:$0xff]
    %v295 = vld [vmem:[#allocation2 + $0x30] sm:$0xff]
    %v296 = vld [vmem:[#allocation2 + $0x38] sm:$0xff]
    %v297 = vld [vmem:[#allocation2 + $0x40] sm:$0xff]
    %v298 = vld [vmem:[#allocation2 + $0x48] sm:$0xff]
    %v299 = vld [vmem:[#allocation2 + $0x50] sm:$0xff]
    %v300 = vld [vmem:[#allocation2 + $0x58] sm:$0xff]
    %v301 = vld [vmem:[#allocation2 + $0x60] sm:$0xff]
    %v302 = vld [vmem:[#allocation2 + $0x68] sm:$0xff]
    %v303 = vld [vmem:[#allocation2 + $0x70] sm:$0xff]
    %v304 = vld [vmem:[#allocation2 + $0x78] sm:$0xff]
    %v305 = vld [vmem:[#allocation2 + $0x80] sm:$0xff]
    %v306 = vld [vmem:[#allocation2 + $0x88] sm:$0xff]
    %v307 = vld [vmem:[#allocation2 + $0x90] sm:$0xff]
    %v308 = vld [vmem:[#allocation2 + $0x98] sm:$0xff]
    %v309 = vld [vmem:[#allocation2 + $0xa0] sm:$0xff]
    %v310 = vld [vmem:[#allocation2 + $0xa8] sm:$0xff]
    %v311 = vld [vmem:[#allocation2 + $0xb0] sm:$0xff]
    %v312 = vld [vmem:[#allocation2 + $0xb8] sm:$0xff]
    %v313 = vld [vmem:[#allocation2 + $0xc0] sm:$0xff]
    %v314 = vld [vmem:[#allocation2 + $0xc8] sm:$0xff]
    %v315 = vld [vmem:[#allocation2 + $0xd0] sm:$0xff]
    %v316 = vld [vmem:[#allocation2 + $0xd8] sm:$0xff]
    %v317 = vld [vmem:[#allocation2 + $0xe0] sm:$0xff]
    %v318 = vld [vmem:[#allocation2 + $0xe8] sm:$0xff]
    %v319 = vld [vmem:[#allocation2 + $0xf0] sm:$0xff]
    %v320 = vld [vmem:[#allocation2 + $0xf8] sm:$0xff]
    %v321 = vld [vmem:[#allocation2 + $0x100] sm:$0xff]
    %v322 = vld [vmem:[#allocation2 + $0x108] sm:$0xff]
    %v323 = vld [vmem:[#allocation2 + $0x110] sm:$0xff]
    %v324 = vld [vmem:[#allocation2 + $0x118] sm:$0xff]
    %v325 = vld [vmem:[#allocation2 + $0x120] sm:$0xff]
    %v326 = vld [vmem:[#allocation2 + $0x128] sm:$0xff]
    %v327 = vld [vmem:[#allocation2 + $0x130] sm:$0xff]
    %v328 = vld [vmem:[#allocation2 + $0x138] sm:$0xff]
    %v329 = vld [vmem:[#allocation2 + $0x140] sm:$0xff]
    %v330 = vld [vmem:[#allocation2 + $0x148] sm:$0xff]
    %v331 = vld [vmem:[#allocation2 + $0x150] sm:$0xff]
    %v332 = vld [vmem:[#allocation2 + $0x158] sm:$0xff]
    %v333 = vld [vmem:[#allocation2 + $0x160] sm:$0xff]
    %v334 = vld [vmem:[#allocation2 + $0x168] sm:$0xff]
    %v335 = vld [vmem:[#allocation2 + $0x170] sm:$0xff]
    %v336 = vld [vmem:[#allocation2 + $0x178] sm:$0xff]
    %v337 = vld [vmem:[#allocation2 + $0x180] sm:$0xff]
    %v338 = vld [vmem:[#allocation2 + $0x188] sm:$0xff]
    %v339 = vld [vmem:[#allocation2 + $0x190] sm:$0xff]
    %v340 = vld [vmem:[#allocation2 + $0x198] sm:$0xff]
    %v341 = vld [vmem:[#allocation2 + $0x1a0] sm:$0xff]
    %v342 = vld [vmem:[#allocation2 + $0x1a8] sm:$0xff]
    %v343 = vld [vmem:[#allocation2 + $0x1b0] sm:$0xff]
    %v344 = vld [vmem:[#allocation2 + $0x1b8] sm:$0xff]
    %v345 = vld [vmem:[#allocation2 + $0x1c0] sm:$0xff]
    %v346 = vld [vmem:[#allocation2 + $0x1c8] sm:$0xff]
    %v347 = vld [vmem:[#allocation2 + $0x1d0] sm:$0xff]
    %v348 = vld [vmem:[#allocation2 + $0x1d8] sm:$0xff]
    %v349 = vld [vmem:[#allocation2 + $0x1e0] sm:$0xff]
    %v350 = vld [vmem:[#allocation2 + $0x1e8] sm:$0xff]
    %v351 = vld [vmem:[#allocation2 + $0x1f0] sm:$0xff]
    %v352 = vld [vmem:[#allocation2 + $0x1f8] sm:$0xff]
    %353 = vmatprep.subr.mxu0 %v350
    %354 = vmatpush1.msra.mxu0 %v349
    %355 = vmatprep.subr.mxu0 %v346
    %356 = vmatpush1.msra.mxu0 %v345
    %357 = vmatprep.subr.mxu0 %v342
    %358 = vmatpush1.msra.mxu0 %v341
    %359 = vmatprep.subr.mxu0 %v338
    %360 = vmatpush1.msra.mxu0 %v337
    %361 = vmatprep.subr.mxu0 %v334
    %362 = vmatpush1.msra.mxu0 %v333
    %363 = vmatprep.subr.mxu0 %v330
    %364 = vmatpush1.msra.mxu0 %v329
    %365 = vmatprep.subr.mxu0 %v326
    %366 = vmatpush1.msra.mxu0 %v325
    %367 = vmatprep.subr.mxu0 %v322
    %368 = vmatpush1.msra.mxu0 %v321
    %369 = vmatprep.subr.mxu0 %v318
    %370 = vmatpush1.msra.mxu0 %v317
    %371 = vmatprep.subr.mxu0 %v314
    %372 = vmatpush1.msra.mxu0 %v313
    %373 = vmatprep.subr.mxu0 %v310
    %374 = vmatpush1.msra.mxu0 %v309
    %375 = vmatprep.subr.mxu0 %v306
    %376 = vmatpush1.msra.mxu0 %v305
    %377 = vmatprep.subr.mxu0 %v302
    %378 = vmatpush1.msra.mxu0 %v301
    %379 = vmatprep.subr.mxu0 %v298
    %380 = vmatpush1.msra.mxu0 %v297
    %381 = vmatprep.subr.mxu0 %v294
    %382 = vmatpush1.msra.mxu0 %v293
    %383 = vmatprep.subr.mxu0 %v290
    %384 = vmatpush1.msra.mxu0 %v289
    %385 = vmatprep.subr.mxu0 0.0
    %386 = vmatpush2.msra.mxu0 0.0
    %387 = vmatprep.subr.mxu0 0.0
    %388 = vmatpush2.msra.mxu0 0.0
    %389 = vmatprep.subr.mxu0 0.0
    %390 = vmatpush2.msra.mxu0 0.0
    %391 = vmatprep.subr.mxu0 0.0
    %392 = vmatpush2.msra.mxu0 0.0
    %393 = vmatprep.subr.mxu0 0.0
    %394 = vmatpush2.msra.mxu0 0.0
    %395 = vmatprep.subr.mxu0 0.0
    %396 = vmatpush2.msra.mxu0 0.0
    %397 = vmatprep.subr.mxu0 0.0
    %398 = vmatpush2.msra.mxu0 0.0
    %399 = vmatprep.subr.mxu0 0.0
    %400 = vmatpush2.msra.mxu0 0.0
    %401 = vmatprep.subr.mxu0 0.0
    %402 = vmatpush2.msra.mxu0 0.0
    %403 = vmatprep.subr.mxu0 0.0
    %404 = vmatpush2.msra.mxu0 0.0
    %405 = vmatprep.subr.mxu0 0.0
    %406 = vmatpush2.msra.mxu0 0.0
    %407 = vmatprep.subr.mxu0 0.0
    %408 = vmatpush2.msra.mxu0 0.0
    %409 = vmatprep.subr.mxu0 0.0
    %410 = vmatpush2.msra.mxu0 0.0
    %411 = vmatprep.subr.mxu0 0.0
    %412 = vmatpush2.msra.mxu0 0.0
    %413 = vmatprep.subr.mxu0 0.0
    %414 = vmatpush2.msra.mxu0 0.0
    %415 = vmatprep.subr.mxu0 0.0
    %416 = vmatpush2.msra.mxu0 0.0
    %417 = vmatprep.mubr.f32.mxu0 0.0
    %418 = vmatmul.mubr.f32.gmra.mxu0 %v282
    %v419 = vpop.f32.mrf.mxu0
    %v420 = vadd.f32 0.0, %v419
    %v421 = vpop.f32.mrf.mxu0
    %v422 = vadd.f32 0.0, %v421
    %423 = vdwg.mxu0
    %424 = vmatprep.subr.mxu0 %v352
    %425 = vmatpush1.msra.mxu0 %v351
    %426 = vmatprep.subr.mxu0 %v348
    %427 = vmatpush1.msra.mxu0 %v347
    %428 = vmatprep.subr.mxu0 %v344
    %429 = vmatpush1.msra.mxu0 %v343
    %430 = vmatprep.subr.mxu0 %v340
    %431 = vmatpush1.msra.mxu0 %v339
    %432 = vmatprep.subr.mxu0 %v336
    %433 = vmatpush1.msra.mxu0 %v335
    %434 = vmatprep.subr.mxu0 %v332
    %435 = vmatpush1.msra.mxu0 %v331
    %436 = vmatprep.subr.mxu0 %v328
    %437 = vmatpush1.msra.mxu0 %v327
    %438 = vmatprep.subr.mxu0 %v324
    %439 = vmatpush1.msra.mxu0 %v323
    %440 = vmatprep.subr.mxu0 %v320
    %441 = vmatpush1.msra.mxu0 %v319
    %442 = vmatprep.subr.mxu0 %v316
    %443 = vmatpush1.msra.mxu0 %v315
    %444 = vmatprep.subr.mxu0 %v312
    %445 = vmatpush1.msra.mxu0 %v311
    %446 = vmatprep.subr.mxu0 %v308
    %447 = vmatpush1.msra.mxu0 %v307
    %448 = vmatprep.subr.mxu0 %v304
    %449 = vmatpush1.msra.mxu0 %v303
    %450 = vmatprep.subr.mxu0 %v300
    %451 = vmatpush1.msra.mxu0 %v299
    %452 = vmatprep.subr.mxu0 %v296
    %453 = vmatpush1.msra.mxu0 %v295
    %454 = vmatprep.subr.mxu0 %v292
    %455 = vmatpush1.msra.mxu0 %v291
    %456 = vmatprep.subr.mxu0 0.0
    %457 = vmatpush2.msra.mxu0 0.0
    %458 = vmatprep.subr.mxu0 0.0
    %459 = vmatpush2.msra.mxu0 0.0
    %460 = vmatprep.subr.mxu0 0.0
    %461 = vmatpush2.msra.mxu0 0.0
    %462 = vmatprep.subr.mxu0 0.0
    %463 = vmatpush2.msra.mxu0 0.0
    %464 = vmatprep.subr.mxu0 0.0
    %465 = vmatpush2.msra.mxu0 0.0
    %466 = vmatprep.subr.mxu0 0.0
    %467 = vmatpush2.msra.mxu0 0.0
    %468 = vmatprep.subr.mxu0 0.0
    %469 = vmatpush2.msra.mxu0 0.0
    %470 = vmatprep.subr.mxu0 0.0
    %471 = vmatpush2.msra.mxu0 0.0
    %472 = vmatprep.subr.mxu0 0.0
    %473 = vmatpush2.msra.mxu0 0.0
    %474 = vmatprep.subr.mxu0 0.0
    %475 = vmatpush2.msra.mxu0 0.0
    %476 = vmatprep.subr.mxu0 0.0
    %477 = vmatpush2.msra.mxu0 0.0
    %478 = vmatprep.subr.mxu0 0.0
    %479 = vmatpush2.msra.mxu0 0.0
    %480 = vmatprep.subr.mxu0 0.0
    %481 = vmatpush2.msra.mxu0 0.0
    %482 = vmatprep.subr.mxu0 0.0
    %483 = vmatpush2.msra.mxu0 0.0
    %484 = vmatprep.subr.mxu0 0.0
    %485 = vmatpush2.msra.mxu0 0.0
    %486 = vmatprep.subr.mxu0 0.0
    %487 = vmatpush2.msra.mxu0 0.0
    %488 = vmatprep.mubr.f32.mxu0 0.0
    %489 = vmatmul.mubr.f32.gmra.mxu0 %v282
    %v490 = vpop.f32.mrf.mxu0
    %v491 = vadd.f32 0.0, %v490
    %v492 = vpop.f32.mrf.mxu0
    %v493 = vadd.f32 0.0, %v492
    %494 = vdwg.mxu0
    %v495 = vadd.f32 %v285, %v420
    %v496 = vadd.f32 %v286, %v422
    %v497 = vadd.f32 %v287, %v491
    %v498 = vadd.f32 %v288, %v493
    %v499 = vmul.f32 %v495, 0.5
    %v500 = vtanh.pop %v499
    %v501 = vmul.f32 %v500, 0.5
    %v502 = vadd.f32 %v501, 0.5
    %v503 = vmul.f32 %v496, 0.5
    %v504 = vtanh.pop %v503
    %v505 = vmul.f32 %v504, 0.5
    %v506 = vadd.f32 %v505, 0.5
    %v507 = vtanh.pop %v497
    %v508 = vmul.f32 %v498, 0.5
    %v509 = vtanh.pop %v508
    %v510 = vmul.f32 %v509, 0.5
    %v511 = vadd.f32 %v510, 0.5
    %v512 = vmul.f32 %v506, %v280
    %v513 = vmul.f32 %v502, %v507
    %v514 = vadd.f32 %v512, %v513
    %v515 = vtanh.pop %v514
    %v516 = vmul.f32 %v511, %v515
    %s517 = scalar_lea.vmem [#allocation9], 8
    %518 = vst [vmem:[%s517] sm:$0xff] %v516
    %s519 = scalar_lea.vmem [#allocation6], 64
    %v520 = vld [vmem:[%s519] sm:$0xff]
    %v521 = vld [vmem:[%s519 + $0x8] sm:$0xff]
    %v522 = vld [vmem:[%s519 + $0x10] sm:$0xff]
    %v523 = vld [vmem:[%s519 + $0x18] sm:$0xff]
    %v524 = vld [vmem:[#allocation2] sm:$0xff]
    %v525 = vld [vmem:[#allocation2 + $0x8] sm:$0xff]
    %v526 = vld [vmem:[#allocation2 + $0x10] sm:$0xff]
    %v527 = vld [vmem:[#allocation2 + $0x18] sm:$0xff]
    %v528 = vld [vmem:[#allocation2 + $0x20] sm:$0xff]
    %v529 = vld [vmem:[#allocation2 + $0x28] sm:$0xff]
    %v530 = vld [vmem:[#allocation2 + $0x30] sm:$0xff]
    %v531 = vld [vmem:[#allocation2 + $0x38] sm:$0xff]
    %v532 = vld [vmem:[#allocation2 + $0x40] sm:$0xff]
    %v533 = vld [vmem:[#allocation2 + $0x48] sm:$0xff]
    %v534 = vld [vmem:[#allocation2 + $0x50] sm:$0xff]
    %v535 = vld [vmem:[#allocation2 + $0x58] sm:$0xff]
    %v536 = vld [vmem:[#allocation2 + $0x60] sm:$0xff]
    %v537 = vld [vmem:[#allocation2 + $0x68] sm:$0xff]
    %v538 = vld [vmem:[#allocation2 + $0x70] sm:$0xff]
    %v539 = vld [vmem:[#allocation2 + $0x78] sm:$0xff]
    %v540 = vld [vmem:[#allocation2 + $0x80] sm:$0xff]
    %v541 = vld [vmem:[#allocation2 + $0x88] sm:$0xff]
    %v542 = vld [vmem:[#allocation2 + $0x90] sm:$0xff]
    %v543 = vld [vmem:[#allocation2 + $0x98] sm:$0xff]
    %v544 = vld [vmem:[#allocation2 + $0xa0] sm:$0xff]
    %v545 = vld [vmem:[#allocation2 + $0xa8] sm:$0xff]
    %v546 = vld [vmem:[#allocation2 + $0xb0] sm:$0xff]
    %v547 = vld [vmem:[#allocation2 + $0xb8] sm:$0xff]
    %v548 = vld [vmem:[#allocation2 + $0xc0] sm:$0xff]
    %v549 = vld [vmem:[#allocation2 + $0xc8] sm:$0xff]
    %v550 = vld [vmem:[#allocation2 + $0xd0] sm:$0xff]
    %v551 = vld [vmem:[#allocation2 + $0xd8] sm:$0xff]
    %v552 = vld [vmem:[#allocation2 + $0xe0] sm:$0xff]
    %v553 = vld [vmem:[#allocation2 + $0xe8] sm:$0xff]
    %v554 = vld [vmem:[#allocation2 + $0xf0] sm:$0xff]
    %v555 = vld [vmem:[#allocation2 + $0xf8] sm:$0xff]
    %v556 = vld [vmem:[#allocation2 + $0x100] sm:$0xff]
    %v557 = vld [vmem:[#allocation2 + $0x108] sm:$0xff]
    %v558 = vld [vmem:[#allocation2 + $0x110] sm:$0xff]
    %v559 = vld [vmem:[#allocation2 + $0x118] sm:$0xff]
    %v560 = vld [vmem:[#allocation2 + $0x120] sm:$0xff]
    %v561 = vld [vmem:[#allocation2 + $0x128] sm:$0xff]
    %v562 = vld [vmem:[#allocation2 + $0x130] sm:$0xff]
    %v563 = vld [vmem:[#allocation2 + $0x138] sm:$0xff]
    %v564 = vld [vmem:[#allocation2 + $0x140] sm:$0xff]
    %v565 = vld [vmem:[#allocation2 + $0x148] sm:$0xff]
    %v566 = vld [vmem:[#allocation2 + $0x150] sm:$0xff]
    %v567 = vld [vmem:[#allocation2 + $0x158] sm:$0xff]
    %v568 = vld [vmem:[#allocation2 + $0x160] sm:$0xff]
    %v569 = vld [vmem:[#allocation2 + $0x168] sm:$0xff]
    %v570 = vld [vmem:[#allocation2 + $0x170] sm:$0xff]
    %v571 = vld [vmem:[#allocation2 + $0x178] sm:$0xff]
    %v572 = vld [vmem:[#allocation2 + $0x180] sm:$0xff]
    %v573 = vld [vmem:[#allocation2 + $0x188] sm:$0xff]
    %v574 = vld [vmem:[#allocation2 + $0x190] sm:$0xff]
    %v575 = vld [vmem:[#allocation2 + $0x198] sm:$0xff]
    %v576 = vld [vmem:[#allocation2 + $0x1a0] sm:$0xff]
    %v577 = vld [vmem:[#allocation2 + $0x1a8] sm:$0xff]
    %v578 = vld [vmem:[#allocation2 + $0x1b0] sm:$0xff]
    %v579 = vld [vmem:[#allocation2 + $0x1b8] sm:$0xff]
    %v580 = vld [vmem:[#allocation2 + $0x1c0] sm:$0xff]
    %v581 = vld [vmem:[#allocation2 + $0x1c8] sm:$0xff]
    %v582 = vld [vmem:[#allocation2 + $0x1d0] sm:$0xff]
    %v583 = vld [vmem:[#allocation2 + $0x1d8] sm:$0xff]
    %v584 = vld [vmem:[#allocation2 + $0x1e0] sm:$0xff]
    %v585 = vld [vmem:[#allocation2 + $0x1e8] sm:$0xff]
    %v586 = vld [vmem:[#allocation2 + $0x1f0] sm:$0xff]
    %v587 = vld [vmem:[#allocation2 + $0x1f8] sm:$0xff]
    %588 = vmatprep.subr.mxu0 %v585
    %589 = vmatpush1.msra.mxu0 %v584
    %590 = vmatprep.subr.mxu0 %v581
    %591 = vmatpush1.msra.mxu0 %v580
    %592 = vmatprep.subr.mxu0 %v577
    %593 = vmatpush1.msra.mxu0 %v576
    %594 = vmatprep.subr.mxu0 %v573
    %595 = vmatpush1.msra.mxu0 %v572
    %596 = vmatprep.subr.mxu0 %v569
    %597 = vmatpush1.msra.mxu0 %v568
    %598 = vmatprep.subr.mxu0 %v565
    %599 = vmatpush1.msra.mxu0 %v564
    %600 = vmatprep.subr.mxu0 %v561
    %601 = vmatpush1.msra.mxu0 %v560
    %602 = vmatprep.subr.mxu0 %v557
    %603 = vmatpush1.msra.mxu0 %v556
    %604 = vmatprep.subr.mxu0 %v553
    %605 = vmatpush1.msra.mxu0 %v552
    %606 = vmatprep.subr.mxu0 %v549
    %607 = vmatpush1.msra.mxu0 %v548
    %608 = vmatprep.subr.mxu0 %v545
    %609 = vmatpush1.msra.mxu0 %v544
    %610 = vmatprep.subr.mxu0 %v541
    %611 = vmatpush1.msra.mxu0 %v540
    %612 = vmatprep.subr.mxu0 %v537
    %613 = vmatpush1.msra.mxu0 %v536
    %614 = vmatprep.subr.mxu0 %v533
    %615 = vmatpush1.msra.mxu0 %v532
    %616 = vmatprep.subr.mxu0 %v529
    %617 = vmatpush1.msra.mxu0 %v528
    %618 = vmatprep.subr.mxu0 %v525
    %619 = vmatpush1.msra.mxu0 %v524
    %620 = vmatprep.subr.mxu0 0.0
    %621 = vmatpush2.msra.mxu0 0.0
    %622 = vmatprep.subr.mxu0 0.0
    %623 = vmatpush2.msra.mxu0 0.0
    %624 = vmatprep.subr.mxu0 0.0
    %625 = vmatpush2.msra.mxu0 0.0
    %626 = vmatprep.subr.mxu0 0.0
    %627 = vmatpush2.msra.mxu0 0.0
    %628 = vmatprep.subr.mxu0 0.0
    %629 = vmatpush2.msra.mxu0 0.0
    %630 = vmatprep.subr.mxu0 0.0
    %631 = vmatpush2.msra.mxu0 0.0
    %632 = vmatprep.subr.mxu0 0.0
    %633 = vmatpush2.msra.mxu0 0.0
    %634 = vmatprep.subr.mxu0 0.0
    %635 = vmatpush2.msra.mxu0 0.0
    %636 = vmatprep.subr.mxu0 0.0
    %637 = vmatpush2.msra.mxu0 0.0
    %638 = vmatprep.subr.mxu0 0.0
    %639 = vmatpush2.msra.mxu0 0.0
    %640 = vmatprep.subr.mxu0 0.0
    %641 = vmatpush2.msra.mxu0 0.0
    %642 = vmatprep.subr.mxu0 0.0
    %643 = vmatpush2.msra.mxu0 0.0
    %644 = vmatprep.subr.mxu0 0.0
    %645 = vmatpush2.msra.mxu0 0.0
    %646 = vmatprep.subr.mxu0 0.0
    %647 = vmatpush2.msra.mxu0 0.0
    %648 = vmatprep.subr.mxu0 0.0
    %649 = vmatpush2.msra.mxu0 0.0
    %650 = vmatprep.subr.mxu0 0.0
    %651 = vmatpush2.msra.mxu0 0.0
    %652 = vmatprep.mubr.f32.mxu0 0.0
    %653 = vmatmul.mubr.f32.gmra.mxu0 %v516
    %v654 = vpop.f32.mrf.mxu0
    %v655 = vadd.f32 0.0, %v654
    %v656 = vpop.f32.mrf.mxu0
    %v657 = vadd.f32 0.0, %v656
    %658 = vdwg.mxu0
    %659 = vmatprep.subr.mxu0 %v587
    %660 = vmatpush1.msra.mxu0 %v586
    %661 = vmatprep.subr.mxu0 %v583
    %662 = vmatpush1.msra.mxu0 %v582
    %663 = vmatprep.subr.mxu0 %v579
    %664 = vmatpush1.msra.mxu0 %v578
    %665 = vmatprep.subr.mxu0 %v575
    %666 = vmatpush1.msra.mxu0 %v574
    %667 = vmatprep.subr.mxu0 %v571
    %668 = vmatpush1.msra.mxu0 %v570
    %669 = vmatprep.subr.mxu0 %v567
    %670 = vmatpush1.msra.mxu0 %v566
    %671 = vmatprep.subr.mxu0 %v563
    %672 = vmatpush1.msra.mxu0 %v562
    %673 = vmatprep.subr.mxu0 %v559
    %674 = vmatpush1.msra.mxu0 %v558
    %675 = vmatprep.subr.mxu0 %v555
    %676 = vmatpush1.msra.mxu0 %v554
    %677 = vmatprep.subr.mxu0 %v551
    %678 = vmatpush1.msra.mxu0 %v550
    %679 = vmatprep.subr.mxu0 %v547
    %680 = vmatpush1.msra.mxu0 %v546
    %681 = vmatprep.subr.mxu0 %v543
    %682 = vmatpush1.msra.mxu0 %v542
    %683 = vmatprep.subr.mxu0 %v539
    %684 = vmatpush1.msra.mxu0 %v538
    %685 = vmatprep.subr.mxu0 %v535
    %686 = vmatpush1.msra.mxu0 %v534
    %687 = vmatprep.subr.mxu0 %v531
    %688 = vmatpush1.msra.mxu0 %v530
    %689 = vmatprep.subr.mxu0 %v527
    %690 = vmatpush1.msra.mxu0 %v526
    %691 = vmatprep.subr.mxu0 0.0
    %692 = vmatpush2.msra.mxu0 0.0
    %693 = vmatprep.subr.mxu0 0.0
    %694 = vmatpush2.msra.mxu0 0.0
    %695 = vmatprep.subr.mxu0 0.0
    %696 = vmatpush2.msra.mxu0 0.0
    %697 = vmatprep.subr.mxu0 0.0
    %698 = vmatpush2.msra.mxu0 0.0
    %699 = vmatprep.subr.mxu0 0.0
    %700 = vmatpush2.msra.mxu0 0.0
    %701 = vmatprep.subr.mxu0 0.0
    %702 = vmatpush2.msra.mxu0 0.0
    %703 = vmatprep.subr.mxu0 0.0
    %704 = vmatpush2.msra.mxu0 0.0
    %705 = vmatprep.subr.mxu0 0.0
    %706 = vmatpush2.msra.mxu0 0.0
    %707 = vmatprep.subr.mxu0 0.0
    %708 = vmatpush2.msra.mxu0 0.0
    %709 = vmatprep.subr.mxu0 0.0
    %710 = vmatpush2.msra.mxu0 0.0
    %711 = vmatprep.subr.mxu0 0.0
    %712 = vmatpush2.msra.mxu0 0.0
    %713 = vmatprep.subr.mxu0 0.0
    %714 = vmatpush2.msra.mxu0 0.0
    %715 = vmatprep.subr.mxu0 0.0
    %716 = vmatpush2.msra.mxu0 0.0
    %717 = vmatprep.subr.mxu0 0.0
    %718 = vmatpush2.msra.mxu0 0.0
    %719 = vmatprep.subr.mxu0 0.0
    %720 = vmatpush2.msra.mxu0 0.0
    %721 = vmatprep.subr.mxu0 0.0
    %722 = vmatpush2.msra.mxu0 0.0
    %723 = vmatprep.mubr.f32.mxu0 0.0
    %724 = vmatmul.mubr.f32.gmra.mxu0 %v516
    %v725 = vpop.f32.mrf.mxu0
    %v726 = vadd.f32 0.0, %v725
    %v727 = vpop.f32.mrf.mxu0
    %v728 = vadd.f32 0.0, %v727
    %729 = vdwg.mxu0
    %v730 = vadd.f32 %v520, %v655
    %v731 = vadd.f32 %v521, %v657
    %v732 = vadd.f32 %v522, %v726
    %v733 = vadd.f32 %v523, %v728
    %v734 = vmul.f32 %v730, 0.5
    %v735 = vtanh.pop %v734
    %v736 = vmul.f32 %v735, 0.5
    %v737 = vadd.f32 %v736, 0.5
    %v738 = vmul.f32 %v731, 0.5
    %v739 = vtanh.pop %v738
    %v740 = vmul.f32 %v739, 0.5
    %v741 = vadd.f32 %v740, 0.5
    %v742 = vtanh.pop %v732
    %v743 = vmul.f32 %v733, 0.5
    %v744 = vtanh.pop %v743
    %v745 = vmul.f32 %v744, 0.5
    %v746 = vadd.f32 %v745, 0.5
    %v747 = vmul.f32 %v741, %v514
    %v748 = vmul.f32 %v737, %v742
    %v749 = vadd.f32 %v747, %v748
    %v750 = vtanh.pop %v749
    %v751 = vmul.f32 %v746, %v750
    %s752 = scalar_lea.vmem [#allocation9], 16
    %753 = vst [vmem:[%s752] sm:$0xff] %v751
    %s754 = scalar_lea.vmem [#allocation6], 96
    %v755 = vld [vmem:[%s754] sm:$0xff]
    %v756 = vld [vmem:[%s754 + $0x8] sm:$0xff]
    %v757 = vld [vmem:[%s754 + $0x10] sm:$0xff]
    %v758 = vld [vmem:[%s754 + $0x18] sm:$0xff]
    %v759 = vld [vmem:[#allocation2] sm:$0xff]
    %v760 = vld [vmem:[#allocation2 + $0x8] sm:$0xff]
    %v761 = vld [vmem:[#allocation2 + $0x10] sm:$0xff]
    %v762 = vld [vmem:[#allocation2 + $0x18] sm:$0xff]
    %v763 = vld [vmem:[#allocation2 + $0x20] sm:$0xff]
    %v764 = vld [vmem:[#allocation2 + $0x28] sm:$0xff]
    %v765 = vld [vmem:[#allocation2 + $0x30] sm:$0xff]
    %v766 = vld [vmem:[#allocation2 + $0x38] sm:$0xff]
    %v767 = vld [vmem:[#allocation2 + $0x40] sm:$0xff]
    %v768 = vld [vmem:[#allocation2 + $0x48] sm:$0xff]
    %v769 = vld [vmem:[#allocation2 + $0x50] sm:$0xff]
    %v770 = vld [vmem:[#allocation2 + $0x58] sm:$0xff]
    %v771 = vld [vmem:[#allocation2 + $0x60] sm:$0xff]
    %v772 = vld [vmem:[#allocation2 + $0x68] sm:$0xff]
    %v773 = vld [vmem:[#allocation2 + $0x70] sm:$0xff]
    %v774 = vld [vmem:[#allocation2 + $0x78] sm:$0xff]
    %v775 = vld [vmem:[#allocation2 + $0x80] sm:$0xff]
    %v776 = vld [vmem:[#allocation2 + $0x88] sm:$0xff]
    %v777 = vld [vmem:[#allocation2 + $0x90] sm:$0xff]
    %v778 = vld [vmem:[#allocation2 + $0x98] sm:$0xff]
    %v779 = vld [vmem:[#allocation2 + $0xa0] sm:$0xff]
    %v780 = vld [vmem:[#allocation2 + $0xa8] sm:$0xff]
    %v781 = vld [vmem:[#allocation2 + $0xb0] sm:$0xff]
    %v782 = vld [vmem:[#allocation2 + $0xb8] sm:$0xff]
    %v783 = vld [vmem:[#allocation2 + $0xc0] sm:$0xff]
    %v784 = vld [vmem:[#allocation2 + $0xc8] sm:$0xff]
    %v785 = vld [vmem:[#allocation2 + $0xd0] sm:$0xff]
    %v786 = vld [vmem:[#allocation2 + $0xd8] sm:$0xff]
    %v787 = vld [vmem:[#allocation2 + $0xe0] sm:$0xff]
    %v788 = vld [vmem:[#allocation2 + $0xe8] sm:$0xff]
    %v789 = vld [vmem:[#allocation2 + $0xf0] sm:$0xff]
    %v790 = vld [vmem:[#allocation2 + $0xf8] sm:$0xff]
    %v791 = vld [vmem:[#allocation2 + $0x100] sm:$0xff]
    %v792 = vld [vmem:[#allocation2 + $0x108] sm:$0xff]
    %v793 = vld [vmem:[#allocation2 + $0x110] sm:$0xff]
    %v794 = vld [vmem:[#allocation2 + $0x118] sm:$0xff]
    %v795 = vld [vmem:[#allocation2 + $0x120] sm:$0xff]
    %v796 = vld [vmem:[#allocation2 + $0x128] sm:$0xff]
    %v797 = vld [vmem:[#allocation2 + $0x130] sm:$0xff]
    %v798 = vld [vmem:[#allocation2 + $0x138] sm:$0xff]
    %v799 = vld [vmem:[#allocation2 + $0x140] sm:$0xff]
    %v800 = vld [vmem:[#allocation2 + $0x148] sm:$0xff]
    %v801 = vld [vmem:[#allocation2 + $0x150] sm:$0xff]
    %v802 = vld [vmem:[#allocation2 + $0x158] sm:$0xff]
    %v803 = vld [vmem:[#allocation2 + $0x160] sm:$0xff]
    %v804 = vld [vmem:[#allocation2 + $0x168] sm:$0xff]
    %v805 = vld [vmem:[#allocation2 + $0x170] sm:$0xff]
    %v806 = vld [vmem:[#allocation2 + $0x178] sm:$0xff]
    %v807 = vld [vmem:[#allocation2 + $0x180] sm:$0xff]
    %v808 = vld [vmem:[#allocation2 + $0x188] sm:$0xff]
    %v809 = vld [vmem:[#allocation2 + $0x190] sm:$0xff]
    %v810 = vld [vmem:[#allocation2 + $0x198] sm:$0xff]
    %v811 = vld [vmem:[#allocation2 + $0x1a0] sm:$0xff]
    %v812 = vld [vmem:[#allocation2 + $0x1a8] sm:$0xff]
    %v813 = vld [vmem:[#allocation2 + $0x1b0] sm:$0xff]
    %v814 = vld [vmem:[#allocation2 + $0x1b8] sm:$0xff]
    %v815 = vld [vmem:[#allocation2 + $0x1c0] sm:$0xff]
    %v816 = vld [vmem:[#allocation2 + $0x1c8] sm:$0xff]
    %v817 = vld [vmem:[#allocation2 + $0x1d0] sm:$0xff]
    %v818 = vld [vmem:[#allocation2 + $0x1d8] sm:$0xff]
    %v819 = vld [vmem:[#allocation2 + $0x1e0] sm:$0xff]
    %v820 = vld [vmem:[#allocation2 + $0x1e8] sm:$0xff]
    %v821 = vld [vmem:[#allocation2 + $0x1f0] sm:$0xff]
    %v822 = vld [vmem:[#allocation2 + $0x1f8] sm:$0xff]
    %823 = vmatprep.subr.mxu0 %v820
    %824 = vmatpush1.msra.mxu0 %v819
    %825 = vmatprep.subr.mxu0 %v816
    %826 = vmatpush1.msra.mxu0 %v815
    %827 = vmatprep.subr.mxu0 %v812
    %828 = vmatpush1.msra.mxu0 %v811
    %829 = vmatprep.subr.mxu0 %v808
    %830 = vmatpush1.msra.mxu0 %v807
    %831 = vmatprep.subr.mxu0 %v804
    %832 = vmatpush1.msra.mxu0 %v803
    %833 = vmatprep.subr.mxu0 %v800
    %834 = vmatpush1.msra.mxu0 %v799
    %835 = vmatprep.subr.mxu0 %v796
    %836 = vmatpush1.msra.mxu0 %v795
    %837 = vmatprep.subr.mxu0 %v792
    %838 = vmatpush1.msra.mxu0 %v791
    %839 = vmatprep.subr.mxu0 %v788
    %840 = vmatpush1.msra.mxu0 %v787
    %841 = vmatprep.subr.mxu0 %v784
    %842 = vmatpush1.msra.mxu0 %v783
    %843 = vmatprep.subr.mxu0 %v780
    %844 = vmatpush1.msra.mxu0 %v779
    %845 = vmatprep.subr.mxu0 %v776
    %846 = vmatpush1.msra.mxu0 %v775
    %847 = vmatprep.subr.mxu0 %v772
    %848 = vmatpush1.msra.mxu0 %v771
    %849 = vmatprep.subr.mxu0 %v768
    %850 = vmatpush1.msra.mxu0 %v767
    %851 = vmatprep.subr.mxu0 %v764
    %852 = vmatpush1.msra.mxu0 %v763
    %853 = vmatprep.subr.mxu0 %v760
    %854 = vmatpush1.msra.mxu0 %v759
    %855 = vmatprep.subr.mxu0 0.0
    %856 = vmatpush2.msra.mxu0 0.0
    %857 = vmatprep.subr.mxu0 0.0
    %858 = vmatpush2.msra.mxu0 0.0
    %859 = vmatprep.subr.mxu0 0.0
    %860 = vmatpush2.msra.mxu0 0.0
    %861 = vmatprep.subr.mxu0 0.0
    %862 = vmatpush2.msra.mxu0 0.0
    %863 = vmatprep.subr.mxu0 0.0
    %864 = vmatpush2.msra.mxu0 0.0
    %865 = vmatprep.subr.mxu0 0.0
    %866 = vmatpush2.msra.mxu0 0.0
    %867 = vmatprep.subr.mxu0 0.0
    %868 = vmatpush2.msra.mxu0 0.0
    %869 = vmatprep.subr.mxu0 0.0
    %870 = vmatpush2.msra.mxu0 0.0
    %871 = vmatprep.subr.mxu0 0.0
    %872 = vmatpush2.msra.mxu0 0.0
    %873 = vmatprep.subr.mxu0 0.0
    %874 = vmatpush2.msra.mxu0 0.0
    %875 = vmatprep.subr.mxu0 0.0
    %876 = vmatpush2.msra.mxu0 0.0
    %877 = vmatprep.subr.mxu0 0.0
    %878 = vmatpush2.msra.mxu0 0.0
    %879 = vmatprep.subr.mxu0 0.0
    %880 = vmatpush2.msra.mxu0 0.0
    %881 = vmatprep.subr.mxu0 0.0
    %882 = vmatpush2.msra.mxu0 0.0
    %883 = vmatprep.subr.mxu0 0.0
    %884 = vmatpush2.msra.mxu0 0.0
    %885 = vmatprep.subr.mxu0 0.0
    %886 = vmatpush2.msra.mxu0 0.0
    %887 = vmatprep.mubr.f32.mxu0 0.0
    %888 = vmatmul.mubr.f32.gmra.mxu0 %v751
    %v889 = vpop.f32.mrf.mxu0
    %v890 = vadd.f32 0.0, %v889
    %v891 = vpop.f32.mrf.mxu0
    %v892 = vadd.f32 0.0, %v891
    %893 = vdwg.mxu0
    %894 = vmatprep.subr.mxu0 %v822
    %895 = vmatpush1.msra.mxu0 %v821
    %896 = vmatprep.subr.mxu0 %v818
    %897 = vmatpush1.msra.mxu0 %v817
    %898 = vmatprep.subr.mxu0 %v814
    %899 = vmatpush1.msra.mxu0 %v813
    %900 = vmatprep.subr.mxu0 %v810
    %901 = vmatpush1.msra.mxu0 %v809
    %902 = vmatprep.subr.mxu0 %v806
    %903 = vmatpush1.msra.mxu0 %v805
    %904 = vmatprep.subr.mxu0 %v802
    %905 = vmatpush1.msra.mxu0 %v801
    %906 = vmatprep.subr.mxu0 %v798
    %907 = vmatpush1.msra.mxu0 %v797
    %908 = vmatprep.subr.mxu0 %v794
    %909 = vmatpush1.msra.mxu0 %v793
    %910 = vmatprep.subr.mxu0 %v790
    %911 = vmatpush1.msra.mxu0 %v789
    %912 = vmatprep.subr.mxu0 %v786
    %913 = vmatpush1.msra.mxu0 %v785
    %914 = vmatprep.subr.mxu0 %v782
    %915 = vmatpush1.msra.mxu0 %v781
    %916 = vmatprep.subr.mxu0 %v778
    %917 = vmatpush1.msra.mxu0 %v777
    %918 = vmatprep.subr.mxu0 %v774
    %919 = vmatpush1.msra.mxu0 %v773
    %920 = vmatprep.subr.mxu0 %v770
    %921 = vmatpush1.msra.mxu0 %v769
    %922 = vmatprep.subr.mxu0 %v766
    %923 = vmatpush1.msra.mxu0 %v765
    %924 = vmatprep.subr.mxu0 %v762
    %925 = vmatpush1.msra.mxu0 %v761
    %926 = vmatprep.subr.mxu0 0.0
    %927 = vmatpush2.msra.mxu0 0.0
    %928 = vmatprep.subr.mxu0 0.0
    %929 = vmatpush2.msra.mxu0 0.0
    %930 = vmatprep.subr.mxu0 0.0
    %931 = vmatpush2.msra.mxu0 0.0
    %932 = vmatprep.subr.mxu0 0.0
    %933 = vmatpush2.msra.mxu0 0.0
    %934 = vmatprep.subr.mxu0 0.0
    %935 = vmatpush2.msra.mxu0 0.0
    %936 = vmatprep.subr.mxu0 0.0
    %937 = vmatpush2.msra.mxu0 0.0
    %938 = vmatprep.subr.mxu0 0.0
    %939 = vmatpush2.msra.mxu0 0.0
    %940 = vmatprep.subr.mxu0 0.0
    %941 = vmatpush2.msra.mxu0 0.0
    %942 = vmatprep.subr.mxu0 0.0
    %943 = vmatpush2.msra.mxu0 0.0
    %944 = vmatprep.subr.mxu0 0.0
    %945 = vmatpush2.msra.mxu0 0.0
    %946 = vmatprep.subr.mxu0 0.0
    %947 = vmatpush2.msra.mxu0 0.0
    %948 = vmatprep.subr.mxu0 0.0
    %949 = vmatpush2.msra.mxu0 0.0
    %950 = vmatprep.subr.mxu0 0.0
    %951 = vmatpush2.msra.mxu0 0.0
    %952 = vmatprep.subr.mxu0 0.0
    %953 = vmatpush2.msra.mxu0 0.0
    %954 = vmatprep.subr.mxu0 0.0
    %955 = vmatpush2.msra.mxu0 0.0
    %956 = vmatprep.subr.mxu0 0.0
    %957 = vmatpush2.msra.mxu0 0.0
    %958 = vmatprep.mubr.f32.mxu0 0.0
    %959 = vmatmul.mubr.f32.gmra.mxu0 %v751
    %v960 = vpop.f32.mrf.mxu0
    %v961 = vadd.f32 0.0, %v960
    %v962 = vpop.f32.mrf.mxu0
    %v963 = vadd.f32 0.0, %v962
    %964 = vdwg.mxu0
    %v965 = vadd.f32 %v755, %v890
    %v966 = vadd.f32 %v756, %v892
    %v967 = vadd.f32 %v757, %v961
    %v968 = vadd.f32 %v758, %v963
    %v969 = vmul.f32 %v965, 0.5
    %v970 = vtanh.pop %v969
    %v971 = vmul.f32 %v970, 0.5
    %v972 = vadd.f32 %v971, 0.5
    %v973 = vmul.f32 %v966, 0.5
    %v974 = vtanh.pop %v973
    %v975 = vmul.f32 %v974, 0.5
    %v976 = vadd.f32 %v975, 0.5
    %v977 = vtanh.pop %v967
    %v978 = vmul.f32 %v968, 0.5
    %v979 = vtanh.pop %v978
    %v980 = vmul.f32 %v979, 0.5
    %v981 = vadd.f32 %v980, 0.5
    %v982 = vmul.f32 %v976, %v749
    %v983 = vmul.f32 %v972, %v977
    %v984 = vadd.f32 %v982, %v983
    %v985 = vtanh.pop %v984
    %v986 = vmul.f32 %v981, %v985
    %s987 = scalar_lea.vmem [#allocation9], 24
    %988 = vst [vmem:[%s987] sm:$0xff] %v986
    %s989 = scalar_lea.vmem [#allocation6], 128
    %v990 = vld [vmem:[%s989] sm:$0xff]
    %v991 = vld [vmem:[%s989 + $0x8] sm:$0xff]
    %v992 = vld [vmem:[%s989 + $0x10] sm:$0xff]
    %v993 = vld [vmem:[%s989 + $0x18] sm:$0xff]
    %v994 = vld [vmem:[#allocation2] sm:$0xff]
    %v995 = vld [vmem:[#allocation2 + $0x8] sm:$0xff]
    %v996 = vld [vmem:[#allocation2 + $0x10] sm:$0xff]
    %v997 = vld [vmem:[#allocation2 + $0x18] sm:$0xff]
    %v998 = vld [vmem:[#allocation2 + $0x20] sm:$0xff]
    %v999 = vld [vmem:[#allocation2 + $0x28] sm:$0xff]
    %v1000 = vld [vmem:[#allocation2 + $0x30] sm:$0xff]
    %v1001 = vld [vmem:[#allocation2 + $0x38] sm:$0xff]
    %v1002 = vld [vmem:[#allocation2 + $0x40] sm:$0xff]
    %v1003 = vld [vmem:[#allocation2 + $0x48] sm:$0xff]
    %v1004 = vld [vmem:[#allocation2 + $0x50] sm:$0xff]
    %v1005 = vld [vmem:[#allocation2 + $0x58] sm:$0xff]
    %v1006 = vld [vmem:[#allocation2 + $0x60] sm:$0xff]
    %v1007 = vld [vmem:[#allocation2 + $0x68] sm:$0xff]
    %v1008 = vld [vmem:[#allocation2 + $0x70] sm:$0xff]
    %v1009 = vld [vmem:[#allocation2 + $0x78] sm:$0xff]
    %v1010 = vld [vmem:[#allocation2 + $0x80] sm:$0xff]
    %v1011 = vld [vmem:[#allocation2 + $0x88] sm:$0xff]
    %v1012 = vld [vmem:[#allocation2 + $0x90] sm:$0xff]
    %v1013 = vld [vmem:[#allocation2 + $0x98] sm:$0xff]
    %v1014 = vld [vmem:[#allocation2 + $0xa0] sm:$0xff]
    %v1015 = vld [vmem:[#allocation2 + $0xa8] sm:$0xff]
    %v1016 = vld [vmem:[#allocation2 + $0xb0] sm:$0xff]
    %v1017 = vld [vmem:[#allocation2 + $0xb8] sm:$0xff]
    %v1018 = vld [vmem:[#allocation2 + $0xc0] sm:$0xff]
    %v1019 = vld [vmem:[#allocation2 + $0xc8] sm:$0xff]
    %v1020 = vld [vmem:[#allocation2 + $0xd0] sm:$0xff]
    %v1021 = vld [vmem:[#allocation2 + $0xd8] sm:$0xff]
    %v1022 = vld [vmem:[#allocation2 + $0xe0] sm:$0xff]
    %v1023 = vld [vmem:[#allocation2 + $0xe8] sm:$0xff]
    %v1024 = vld [vmem:[#allocation2 + $0xf0] sm:$0xff]
    %v1025 = vld [vmem:[#allocation2 + $0xf8] sm:$0xff]
    %v1026 = vld [vmem:[#allocation2 + $0x100] sm:$0xff]
    %v1027 = vld [vmem:[#allocation2 + $0x108] sm:$0xff]
    %v1028 = vld [vmem:[#allocation2 + $0x110] sm:$0xff]
    %v1029 = vld [vmem:[#allocation2 + $0x118] sm:$0xff]
    %v1030 = vld [vmem:[#allocation2 + $0x120] sm:$0xff]
    %v1031 = vld [vmem:[#allocation2 + $0x128] sm:$0xff]
    %v1032 = vld [vmem:[#allocation2 + $0x130] sm:$0xff]
    %v1033 = vld [vmem:[#allocation2 + $0x138] sm:$0xff]
    %v1034 = vld [vmem:[#allocation2 + $0x140] sm:$0xff]
    %v1035 = vld [vmem:[#allocation2 + $0x148] sm:$0xff]
    %v1036 = vld [vmem:[#allocation2 + $0x150] sm:$0xff]
    %v1037 = vld [vmem:[#allocation2 + $0x158] sm:$0xff]
    %v1038 = vld [vmem:[#allocation2 + $0x160] sm:$0xff]
    %v1039 = vld [vmem:[#allocation2 + $0x168] sm:$0xff]
    %v1040 = vld [vmem:[#allocation2 + $0x170] sm:$0xff]
    %v1041 = vld [vmem:[#allocation2 + $0x178] sm:$0xff]
    %v1042 = vld [vmem:[#allocation2 + $0x180] sm:$0xff]
    %v1043 = vld [vmem:[#allocation2 + $0x188] sm:$0xff]
    %v1044 = vld [vmem:[#allocation2 + $0x190] sm:$0xff]
    %v1045 = vld [vmem:[#allocation2 + $0x198] sm:$0xff]
    %v1046 = vld [vmem:[#allocation2 + $0x1a0] sm:$0xff]
    %v1047 = vld [vmem:[#allocation2 + $0x1a8] sm:$0xff]
    %v1048 = vld [vmem:[#allocation2 + $0x1b0] sm:$0xff]
    %v1049 = vld [vmem:[#allocation2 + $0x1b8] sm:$0xff]
    %v1050 = vld [vmem:[#allocation2 + $0x1c0] sm:$0xff]
    %v1051 = vld [vmem:[#allocation2 + $0x1c8] sm:$0xff]
    %v1052 = vld [vmem:[#allocation2 + $0x1d0] sm:$0xff]
    %v1053 = vld [vmem:[#allocation2 + $0x1d8] sm:$0xff]
    %v1054 = vld [vmem:[#allocation2 + $0x1e0] sm:$0xff]
    %v1055 = vld [vmem:[#allocation2 + $0x1e8] sm:$0xff]
    %v1056 = vld [vmem:[#allocation2 + $0x1f0] sm:$0xff]
    %v1057 = vld [vmem:[#allocation2 + $0x1f8] sm:$0xff]
    %1058 = vmatprep.subr.mxu0 %v1055
    %1059 = vmatpush1.msra.mxu0 %v1054
    %1060 = vmatprep.subr.mxu0 %v1051
    %1061 = vmatpush1.msra.mxu0 %v1050
    %1062 = vmatprep.subr.mxu0 %v1047
    %1063 = vmatpush1.msra.mxu0 %v1046
    %1064 = vmatprep.subr.mxu0 %v1043
    %1065 = vmatpush1.msra.mxu0 %v1042
    %1066 = vmatprep.subr.mxu0 %v1039
    %1067 = vmatpush1.msra.mxu0 %v1038
    %1068 = vmatprep.subr.mxu0 %v1035
    %1069 = vmatpush1.msra.mxu0 %v1034
    %1070 = vmatprep.subr.mxu0 %v1031
    %1071 = vmatpush1.msra.mxu0 %v1030
    %1072 = vmatprep.subr.mxu0 %v1027
    %1073 = vmatpush1.msra.mxu0 %v1026
    %1074 = vmatprep.subr.mxu0 %v1023
    %1075 = vmatpush1.msra.mxu0 %v1022
    %1076 = vmatprep.subr.mxu0 %v1019
    %1077 = vmatpush1.msra.mxu0 %v1018
    %1078 = vmatprep.subr.mxu0 %v1015
    %1079 = vmatpush1.msra.mxu0 %v1014
    %1080 = vmatprep.subr.mxu0 %v1011
    %1081 = vmatpush1.msra.mxu0 %v1010
    %1082 = vmatprep.subr.mxu0 %v1007
    %1083 = vmatpush1.msra.mxu0 %v1006
    %1084 = vmatprep.subr.mxu0 %v1003
    %1085 = vmatpush1.msra.mxu0 %v1002
    %1086 = vmatprep.subr.mxu0 %v999
    %1087 = vmatpush1.msra.mxu0 %v998
    %1088 = vmatprep.subr.mxu0 %v995
    %1089 = vmatpush1.msra.mxu0 %v994
    %1090 = vmatprep.subr.mxu0 0.0
    %1091 = vmatpush2.msra.mxu0 0.0
    %1092 = vmatprep.subr.mxu0 0.0
    %1093 = vmatpush2.msra.mxu0 0.0
    %1094 = vmatprep.subr.mxu0 0.0
    %1095 = vmatpush2.msra.mxu0 0.0
    %1096 = vmatprep.subr.mxu0 0.0
    %1097 = vmatpush2.msra.mxu0 0.0
    %1098 = vmatprep.subr.mxu0 0.0
    %1099 = vmatpush2.msra.mxu0 0.0
    %1100 = vmatprep.subr.mxu0 0.0
    %1101 = vmatpush2.msra.mxu0 0.0
    %1102 = vmatprep.subr.mxu0 0.0
    %1103 = vmatpush2.msra.mxu0 0.0
    %1104 = vmatprep.subr.mxu0 0.0
    %1105 = vmatpush2.msra.mxu0 0.0
    %1106 = vmatprep.subr.mxu0 0.0
    %1107 = vmatpush2.msra.mxu0 0.0
    %1108 = vmatprep.subr.mxu0 0.0
    %1109 = vmatpush2.msra.mxu0 0.0
    %1110 = vmatprep.subr.mxu0 0.0
    %1111 = vmatpush2.msra.mxu0 0.0
    %1112 = vmatprep.subr.mxu0 0.0
    %1113 = vmatpush2.msra.mxu0 0.0
    %1114 = vmatprep.subr.mxu0 0.0
    %1115 = vmatpush2.msra.mxu0 0.0
    %1116 = vmatprep.subr.mxu0 0.0
    %1117 = vmatpush2.msra.mxu0 0.0
    %1118 = vmatprep.subr.mxu0 0.0
    %1119 = vmatpush2.msra.mxu0 0.0
    %1120 = vmatprep.subr.mxu0 0.0
    %1121 = vmatpush2.msra.mxu0 0.0
    %1122 = vmatprep.mubr.f32.mxu0 0.0
    %1123 = vmatmul.mubr.f32.gmra.mxu0 %v986
    %v1124 = vpop.f32.mrf.mxu0
    %v1125 = vadd.f32 0.0, %v1124
    %v1126 = vpop.f32.mrf.mxu0
    %v1127 = vadd.f32 0.0, %v1126
    %1128 = vdwg.mxu0
    %1129 = vmatprep.subr.mxu0 %v1057
    %1130 = vmatpush1.msra.mxu0 %v1056
    %1131 = vmatprep.subr.mxu0 %v1053
    %1132 = vmatpush1.msra.mxu0 %v1052
    %1133 = vmatprep.subr.mxu0 %v1049
    %1134 = vmatpush1.msra.mxu0 %v1048
    %1135 = vmatprep.subr.mxu0 %v1045
    %1136 = vmatpush1.msra.mxu0 %v1044
    %1137 = vmatprep.subr.mxu0 %v1041
    %1138 = vmatpush1.msra.mxu0 %v1040
    %1139 = vmatprep.subr.mxu0 %v1037
    %1140 = vmatpush1.msra.mxu0 %v1036
    %1141 = vmatprep.subr.mxu0 %v1033
    %1142 = vmatpush1.msra.mxu0 %v1032
    %1143 = vmatprep.subr.mxu0 %v1029
    %1144 = vmatpush1.msra.mxu0 %v1028
    %1145 = vmatprep.subr.mxu0 %v1025
    %1146 = vmatpush1.msra.mxu0 %v1024
    %1147 = vmatprep.subr.mxu0 %v1021
    %1148 = vmatpush1.msra.mxu0 %v1020
    %1149 = vmatprep.subr.mxu0 %v1017
    %1150 = vmatpush1.msra.mxu0 %v1016
    %1151 = vmatprep.subr.mxu0 %v1013
    %1152 = vmatpush1.msra.mxu0 %v1012
    %1153 = vmatprep.subr.mxu0 %v1009
    %1154 = vmatpush1.msra.mxu0 %v1008
    %1155 = vmatprep.subr.mxu0 %v1005
    %1156 = vmatpush1.msra.mxu0 %v1004
    %1157 = vmatprep.subr.mxu0 %v1001
    %1158 = vmatpush1.msra.mxu0 %v1000
    %1159 = vmatprep.subr.mxu0 %v997
    %1160 = vmatpush1.msra.mxu0 %v996
    %1161 = vmatprep.subr.mxu0 0.0
    %1162 = vmatpush2.msra.mxu0 0.0
    %1163 = vmatprep.subr.mxu0 0.0
    %1164 = vmatpush2.msra.mxu0 0.0
    %1165 = vmatprep.subr.mxu0 0.0
    %1166 = vmatpush2.msra.mxu0 0.0
    %1167 = vmatprep.subr.mxu0 0.0
    %1168 = vmatpush2.msra.mxu0 0.0
    %1169 = vmatprep.subr.mxu0 0.0
    %1170 = vmatpush2.msra.mxu0 0.0
    %1171 = vmatprep.subr.mxu0 0.0
    %1172 = vmatpush2.msra.mxu0 0.0
    %1173 = vmatprep.subr.mxu0 0.0
    %1174 = vmatpush2.msra.mxu0 0.0
    %1175 = vmatprep.subr.mxu0 0.0
    %1176 = vmatpush2.msra.mxu0 0.0
    %1177 = vmatprep.subr.mxu0 0.0
    %1178 = vmatpush2.msra.mxu0 0.0
    %1179 = vmatprep.subr.mxu0 0.0
    %1180 = vmatpush2.msra.mxu0 0.0
    %1181 = vmatprep.subr.mxu0 0.0
    %1182 = vmatpush2.msra.mxu0 0.0
    %1183 = vmatprep.subr.mxu0 0.0
    %1184 = vmatpush2.msra.mxu0 0.0
    %1185 = vmatprep.subr.mxu0 0.0
    %1186 = vmatpush2.msra.mxu0 0.0
    %1187 = vmatprep.subr.mxu0 0.0
    %1188 = vmatpush2.msra.mxu0 0.0
    %1189 = vmatprep.subr.mxu0 0.0
    %1190 = vmatpush2.msra.mxu0 0.0
    %1191 = vmatprep.subr.mxu0 0.0
    %1192 = vmatpush2.msra.mxu0 0.0
    %1193 = vmatprep.mubr.f32.mxu0 0.0
    %1194 = vmatmul.mubr.f32.gmra.mxu0 %v986
    %v1195 = vpop.f32.mrf.mxu0
    %v1196 = vadd.f32 0.0, %v1195
    %v1197 = vpop.f32.mrf.mxu0
    %v1198 = vadd.f32 0.0, %v1197
    %1199 = vdwg.mxu0
    %v1200 = vadd.f32 %v990, %v1125
    %v1201 = vadd.f32 %v991, %v1127
    %v1202 = vadd.f32 %v992, %v1196
    %v1203 = vadd.f32 %v993, %v1198
    %v1204 = vmul.f32 %v1200, 0.5
    %v1205 = vtanh.pop %v1204
    %v1206 = vmul.f32 %v1205, 0.5
    %v1207 = vadd.f32 %v1206, 0.5
    %v1208 = vmul.f32 %v1201, 0.5
    %v1209 = vtanh.pop %v1208
    %v1210 = vmul.f32 %v1209, 0.5
    %v1211 = vadd.f32 %v1210, 0.5
    %v1212 = vtanh.pop %v1202
    %v1213 = vmul.f32 %v1203, 0.5
    %v1214 = vtanh.pop %v1213
    %v1215 = vmul.f32 %v1214, 0.5
    %v1216 = vadd.f32 %v1215, 0.5
    %v1217 = vmul.f32 %v1211, %v984
    %v1218 = vmul.f32 %v1207, %v1212
    %v1219 = vadd.f32 %v1217, %v1218
    %v1220 = vtanh.pop %v1219
    %v1221 = vmul.f32 %v1216, %v1220
    %s1222 = scalar_lea.vmem [#allocation9], 32
    %1223 = vst [vmem:[%s1222] sm:$0xff] %v1221
    %s1224 = scalar_lea.vmem [#allocation6], 160
    %v1225 = vld [vmem:[%s1224] sm:$0xff]
    %v1226 = vld [vmem:[%s1224 + $0x8] sm:$0xff]
    %v1227 = vld [vmem:[%s1224 + $0x10] sm:$0xff]
    %v1228 = vld [vmem:[%s1224 + $0x18] sm:$0xff]
    %v1229 = vld [vmem:[#allocation2] sm:$0xff]
    %v1230 = vld [vmem:[#allocation2 + $0x8] sm:$0xff]
    %v1231 = vld [vmem:[#allocation2 + $0x10] sm:$0xff]
    %v1232 = vld [vmem:[#allocation2 + $0x18] sm:$0xff]
    %v1233 = vld [vmem:[#allocation2 + $0x20] sm:$0xff]
    %v1234 = vld [vmem:[#allocation2 + $0x28] sm:$0xff]
    %v1235 = vld [vmem:[#allocation2 + $0x30] sm:$0xff]
    %v1236 = vld [vmem:[#allocation2 + $0x38] sm:$0xff]
    %v1237 = vld [vmem:[#allocation2 + $0x40] sm:$0xff]
    %v1238 = vld [vmem:[#allocation2 + $0x48] sm:$0xff]
    %v1239 = vld [vmem:[#allocation2 + $0x50] sm:$0xff]
    %v1240 = vld [vmem:[#allocation2 + $0x58] sm:$0xff]
    %v1241 = vld [vmem:[#allocation2 + $0x60] sm:$0xff]
    %v1242 = vld [vmem:[#allocation2 + $0x68] sm:$0xff]
    %v1243 = vld [vmem:[#allocation2 + $0x70] sm:$0xff]
    %v1244 = vld [vmem:[#allocation2 + $0x78] sm:$0xff]
    %v1245 = vld [vmem:[#allocation2 + $0x80] sm:$0xff]
    %v1246 = vld [vmem:[#allocation2 + $0x88] sm:$0xff]
    %v1247 = vld [vmem:[#allocation2 + $0x90] sm:$0xff]
    %v1248 = vld [vmem:[#allocation2 + $0x98] sm:$0xff]
    %v1249 = vld [vmem:[#allocation2 + $0xa0] sm:$0xff]
    %v1250 = vld [vmem:[#allocation2 + $0xa8] sm:$0xff]
    %v1251 = vld [vmem:[#allocation2 + $0xb0] sm:$0xff]
    %v1252 = vld [vmem:[#allocation2 + $0xb8] sm:$0xff]
    %v1253 = vld [vmem:[#allocation2 + $0xc0] sm:$0xff]
    %v1254 = vld [vmem:[#allocation2 + $0xc8] sm:$0xff]
    %v1255 = vld [vmem:[#allocation2 + $0xd0] sm:$0xff]
    %v1256 = vld [vmem:[#allocation2 + $0xd8] sm:$0xff]
    %v1257 = vld [vmem:[#allocation2 + $0xe0] sm:$0xff]
    %v1258 = vld [vmem:[#allocation2 + $0xe8] sm:$0xff]
    %v1259 = vld [vmem:[#allocation2 + $0xf0] sm:$0xff]
    %v1260 = vld [vmem:[#allocation2 + $0xf8] sm:$0xff]
    %v1261 = vld [vmem:[#allocation2 + $0x100] sm:$0xff]
    %v1262 = vld [vmem:[#allocation2 + $0x108] sm:$0xff]
    %v1263 = vld [vmem:[#allocation2 + $0x110] sm:$0xff]
    %v1264 = vld [vmem:[#allocation2 + $0x118] sm:$0xff]
    %v1265 = vld [vmem:[#allocation2 + $0x120] sm:$0xff]
    %v1266 = vld [vmem:[#allocation2 + $0x128] sm:$0xff]
    %v1267 = vld [vmem:[#allocation2 + $0x130] sm:$0xff]
    %v1268 = vld [vmem:[#allocation2 + $0x138] sm:$0xff]
    %v1269 = vld [vmem:[#allocation2 + $0x140] sm:$0xff]
    %v1270 = vld [vmem:[#allocation2 + $0x148] sm:$0xff]
    %v1271 = vld [vmem:[#allocation2 + $0x150] sm:$0xff]
    %v1272 = vld [vmem:[#allocation2 + $0x158] sm:$0xff]
    %v1273 = vld [vmem:[#allocation2 + $0x160] sm:$0xff]
    %v1274 = vld [vmem:[#allocation2 + $0x168] sm:$0xff]
    %v1275 = vld [vmem:[#allocation2 + $0x170] sm:$0xff]
    %v1276 = vld [vmem:[#allocation2 + $0x178] sm:$0xff]
    %v1277 = vld [vmem:[#allocation2 + $0x180] sm:$0xff]
    %v1278 = vld [vmem:[#allocation2 + $0x188] sm:$0xff]
    %v1279 = vld [vmem:[#allocation2 + $0x190] sm:$0xff]
    %v1280 = vld [vmem:[#allocation2 + $0x198] sm:$0xff]
    %v1281 = vld [vmem:[#allocation2 + $0x1a0] sm:$0xff]
    %v1282 = vld [vmem:[#allocation2 + $0x1a8] sm:$0xff]
    %v1283 = vld [vmem:[#allocation2 + $0x1b0] sm:$0xff]
    %v1284 = vld [vmem:[#allocation2 + $0x1b8] sm:$0xff]
    %v1285 = vld [vmem:[#allocation2 + $0x1c0] sm:$0xff]
    %v1286 = vld [vmem:[#allocation2 + $0x1c8] sm:$0xff]
    %v1287 = vld [vmem:[#allocation2 + $0x1d0] sm:$0xff]
    %v1288 = vld [vmem:[#allocation2 + $0x1d8] sm:$0xff]
    %v1289 = vld [vmem:[#allocation2 + $0x1e0] sm:$0xff]
    %v1290 = vld [vmem:[#allocation2 + $0x1e8] sm:$0xff]
    %v1291 = vld [vmem:[#allocation2 + $0x1f0] sm:$0xff]
    %v1292 = vld [vmem:[#allocation2 + $0x1f8] sm:$0xff]
    %1293 = vmatprep.subr.mxu0 %v1290
    %1294 = vmatpush1.msra.mxu0 %v1289
    %1295 = vmatprep.subr.mxu0 %v1286
    %1296 = vmatpush1.msra.mxu0 %v1285
    %1297 = vmatprep.subr.mxu0 %v1282
    %1298 = vmatpush1.msra.mxu0 %v1281
    %1299 = vmatprep.subr.mxu0 %v1278
    %1300 = vmatpush1.msra.mxu0 %v1277
    %1301 = vmatprep.subr.mxu0 %v1274
    %1302 = vmatpush1.msra.mxu0 %v1273
    %1303 = vmatprep.subr.mxu0 %v1270
    %1304 = vmatpush1.msra.mxu0 %v1269
    %1305 = vmatprep.subr.mxu0 %v1266
    %1306 = vmatpush1.msra.mxu0 %v1265
    %1307 = vmatprep.subr.mxu0 %v1262
    %1308 = vmatpush1.msra.mxu0 %v1261
    %1309 = vmatprep.subr.mxu0 %v1258
    %1310 = vmatpush1.msra.mxu0 %v1257
    %1311 = vmatprep.subr.mxu0 %v1254
    %1312 = vmatpush1.msra.mxu0 %v1253
    %1313 = vmatprep.subr.mxu0 %v1250
    %1314 = vmatpush1.msra.mxu0 %v1249
    %1315 = vmatprep.subr.mxu0 %v1246
    %1316 = vmatpush1.msra.mxu0 %v1245
    %1317 = vmatprep.subr.mxu0 %v1242
    %1318 = vmatpush1.msra.mxu0 %v1241
    %1319 = vmatprep.subr.mxu0 %v1238
    %1320 = vmatpush1.msra.mxu0 %v1237
    %1321 = vmatprep.subr.mxu0 %v1234
    %1322 = vmatpush1.msra.mxu0 %v1233
    %1323 = vmatprep.subr.mxu0 %v1230
    %1324 = vmatpush1.msra.mxu0 %v1229
    %1325 = vmatprep.subr.mxu0 0.0
    %1326 = vmatpush2.msra.mxu0 0.0
    %1327 = vmatprep.subr.mxu0 0.0
    %1328 = vmatpush2.msra.mxu0 0.0
    %1329 = vmatprep.subr.mxu0 0.0
    %1330 = vmatpush2.msra.mxu0 0.0
    %1331 = vmatprep.subr.mxu0 0.0
    %1332 = vmatpush2.msra.mxu0 0.0
    %1333 = vmatprep.subr.mxu0 0.0
    %1334 = vmatpush2.msra.mxu0 0.0
    %1335 = vmatprep.subr.mxu0 0.0
    %1336 = vmatpush2.msra.mxu0 0.0
    %1337 = vmatprep.subr.mxu0 0.0
    %1338 = vmatpush2.msra.mxu0 0.0
    %1339 = vmatprep.subr.mxu0 0.0
    %1340 = vmatpush2.msra.mxu0 0.0
    %1341 = vmatprep.subr.mxu0 0.0
    %1342 = vmatpush2.msra.mxu0 0.0
    %1343 = vmatprep.subr.mxu0 0.0
    %1344 = vmatpush2.msra.mxu0 0.0
    %1345 = vmatprep.subr.mxu0 0.0
    %1346 = vmatpush2.msra.mxu0 0.0
    %1347 = vmatprep.subr.mxu0 0.0
    %1348 = vmatpush2.msra.mxu0 0.0
    %1349 = vmatprep.subr.mxu0 0.0
    %1350 = vmatpush2.msra.mxu0 0.0
    %1351 = vmatprep.subr.mxu0 0.0
    %1352 = vmatpush2.msra.mxu0 0.0
    %1353 = vmatprep.subr.mxu0 0.0
    %1354 = vmatpush2.msra.mxu0 0.0
    %1355 = vmatprep.subr.mxu0 0.0
    %1356 = vmatpush2.msra.mxu0 0.0
    %1357 = vmatprep.mubr.f32.mxu0 0.0
    %1358 = vmatmul.mubr.f32.gmra.mxu0 %v1221
    %v1359 = vpop.f32.mrf.mxu0
    %v1360 = vadd.f32 0.0, %v1359
    %v1361 = vpop.f32.mrf.mxu0
    %v1362 = vadd.f32 0.0, %v1361
    %1363 = vdwg.mxu0
    %1364 = vmatprep.subr.mxu0 %v1292
    %1365 = vmatpush1.msra.mxu0 %v1291
    %1366 = vmatprep.subr.mxu0 %v1288
    %1367 = vmatpush1.msra.mxu0 %v1287
    %1368 = vmatprep.subr.mxu0 %v1284
    %1369 = vmatpush1.msra.mxu0 %v1283
    %1370 = vmatprep.subr.mxu0 %v1280
    %1371 = vmatpush1.msra.mxu0 %v1279
    %1372 = vmatprep.subr.mxu0 %v1276
    %1373 = vmatpush1.msra.mxu0 %v1275
    %1374 = vmatprep.subr.mxu0 %v1272
    %1375 = vmatpush1.msra.mxu0 %v1271
    %1376 = vmatprep.subr.mxu0 %v1268
    %1377 = vmatpush1.msra.mxu0 %v1267
    %1378 = vmatprep.subr.mxu0 %v1264
    %1379 = vmatpush1.msra.mxu0 %v1263
    %1380 = vmatprep.subr.mxu0 %v1260
    %1381 = vmatpush1.msra.mxu0 %v1259
    %1382 = vmatprep.subr.mxu0 %v1256
    %1383 = vmatpush1.msra.mxu0 %v1255
    %1384 = vmatprep.subr.mxu0 %v1252
    %1385 = vmatpush1.msra.mxu0 %v1251
    %1386 = vmatprep.subr.mxu0 %v1248
    %1387 = vmatpush1.msra.mxu0 %v1247
    %1388 = vmatprep.subr.mxu0 %v1244
    %1389 = vmatpush1.msra.mxu0 %v1243
    %1390 = vmatprep.subr.mxu0 %v1240
    %1391 = vmatpush1.msra.mxu0 %v1239
    %1392 = vmatprep.subr.mxu0 %v1236
    %1393 = vmatpush1.msra.mxu0 %v1235
    %1394 = vmatprep.subr.mxu0 %v1232
    %1395 = vmatpush1.msra.mxu0 %v1231
    %1396 = vmatprep.subr.mxu0 0.0
    %1397 = vmatpush2.msra.mxu0 0.0
    %1398 = vmatprep.subr.mxu0 0.0
    %1399 = vmatpush2.msra.mxu0 0.0
    %1400 = vmatprep.subr.mxu0 0.0
    %1401 = vmatpush2.msra.mxu0 0.0
    %1402 = vmatprep.subr.mxu0 0.0
    %1403 = vmatpush2.msra.mxu0 0.0
    %1404 = vmatprep.subr.mxu0 0.0
    %1405 = vmatpush2.msra.mxu0 0.0
    %1406 = vmatprep.subr.mxu0 0.0
    %1407 = vmatpush2.msra.mxu0 0.0
    %1408 = vmatprep.subr.mxu0 0.0
    %1409 = vmatpush2.msra.mxu0 0.0
    %1410 = vmatprep.subr.mxu0 0.0
    %1411 = vmatpush2.msra.mxu0 0.0
    %1412 = vmatprep.subr.mxu0 0.0
    %1413 = vmatpush2.msra.mxu0 0.0
    %1414 = vmatprep.subr.mxu0 0.0
    %1415 = vmatpush2.msra.mxu0 0.0
    %1416 = vmatprep.subr.mxu0 0.0
    %1417 = vmatpush2.msra.mxu0 0.0
    %1418 = vmatprep.subr.mxu0 0.0
    %1419 = vmatpush2.msra.mxu0 0.0
    %1420 = vmatprep.subr.mxu0 0.0
    %1421 = vmatpush2.msra.mxu0 0.0
    %1422 = vmatprep.subr.mxu0 0.0
    %1423 = vmatpush2.msra.mxu0 0.0
    %1424 = vmatprep.subr.mxu0 0.0
    %1425 = vmatpush2.msra.mxu0 0.0
    %1426 = vmatprep.subr.mxu0 0.0
    %1427 = vmatpush2.msra.mxu0 0.0
    %1428 = vmatprep.mubr.f32.mxu0 0.0
    %1429 = vmatmul.mubr.f32.gmra.mxu0 %v1221
    %v1430 = vpop.f32.mrf.mxu0
    %v1431 = vadd.f32 0.0, %v1430
    %v1432 = vpop.f32.mrf.mxu0
    %v1433 = vadd.f32 0.0, %v1432
    %1434 = vdwg.mxu0
    %v1435 = vadd.f32 %v1225, %v1360
    %v1436 = vadd.f32 %v1226, %v1362
    %v1437 = vadd.f32 %v1227, %v1431
    %v1438 = vadd.f32 %v1228, %v1433
    %v1439 = vmul.f32 %v1435, 0.5
    %v1440 = vtanh.pop %v1439
    %v1441 = vmul.f32 %v1440, 0.5
    %v1442 = vadd.f32 %v1441, 0.5
    %v1443 = vmul.f32 %v1436, 0.5
    %v1444 = vtanh.pop %v1443
    %v1445 = vmul.f32 %v1444, 0.5
    %v1446 = vadd.f32 %v1445, 0.5
    %v1447 = vtanh.pop %v1437
    %v1448 = vmul.f32 %v1438, 0.5
    %v1449 = vtanh.pop %v1448
    %v1450 = vmul.f32 %v1449, 0.5
    %v1451 = vadd.f32 %v1450, 0.5
    %v1452 = vmul.f32 %v1446, %v1219
    %v1453 = vmul.f32 %v1442, %v1447
    %v1454 = vadd.f32 %v1452, %v1453
    %v1455 = vtanh.pop %v1454
    %v1456 = vmul.f32 %v1451, %v1455
    %s1457 = scalar_lea.vmem [#allocation9], 40
    %1458 = vst [vmem:[%s1457] sm:$0xff] %v1456
    %s1459 = scalar_lea.vmem [#allocation6], 192
    %v1460 = vld [vmem:[%s1459] sm:$0xff]
    %v1461 = vld [vmem:[%s1459 + $0x8] sm:$0xff]
    %v1462 = vld [vmem:[%s1459 + $0x10] sm:$0xff]
    %v1463 = vld [vmem:[%s1459 + $0x18] sm:$0xff]
    %v1464 = vld [vmem:[#allocation2] sm:$0xff]
    %v1465 = vld [vmem:[#allocation2 + $0x8] sm:$0xff]
    %v1466 = vld [vmem:[#allocation2 + $0x10] sm:$0xff]
    %v1467 = vld [vmem:[#allocation2 + $0x18] sm:$0xff]
    %v1468 = vld [vmem:[#allocation2 + $0x20] sm:$0xff]
    %v1469 = vld [vmem:[#allocation2 + $0x28] sm:$0xff]
    %v1470 = vld [vmem:[#allocation2 + $0x30] sm:$0xff]
    %v1471 = vld [vmem:[#allocation2 + $0x38] sm:$0xff]
    %v1472 = vld [vmem:[#allocation2 + $0x40] sm:$0xff]
    %v1473 = vld [vmem:[#allocation2 + $0x48] sm:$0xff]
    %v1474 = vld [vmem:[#allocation2 + $0x50] sm:$0xff]
    %v1475 = vld [vmem:[#allocation2 + $0x58] sm:$0xff]
    %v1476 = vld [vmem:[#allocation2 + $0x60] sm:$0xff]
    %v1477 = vld [vmem:[#allocation2 + $0x68] sm:$0xff]
    %v1478 = vld [vmem:[#allocation2 + $0x70] sm:$0xff]
    %v1479 = vld [vmem:[#allocation2 + $0x78] sm:$0xff]
    %v1480 = vld [vmem:[#allocation2 + $0x80] sm:$0xff]
    %v1481 = vld [vmem:[#allocation2 + $0x88] sm:$0xff]
    %v1482 = vld [vmem:[#allocation2 + $0x90] sm:$0xff]
    %v1483 = vld [vmem:[#allocation2 + $0x98] sm:$0xff]
    %v1484 = vld [vmem:[#allocation2 + $0xa0] sm:$0xff]
    %v1485 = vld [vmem:[#allocation2 + $0xa8] sm:$0xff]
    %v1486 = vld [vmem:[#allocation2 + $0xb0] sm:$0xff]
    %v1487 = vld [vmem:[#allocation2 + $0xb8] sm:$0xff]
    %v1488 = vld [vmem:[#allocation2 + $0xc0] sm:$0xff]
    %v1489 = vld [vmem:[#allocation2 + $0xc8] sm:$0xff]
    %v1490 = vld [vmem:[#allocation2 + $0xd0] sm:$0xff]
    %v1491 = vld [vmem:[#allocation2 + $0xd8] sm:$0xff]
    %v1492 = vld [vmem:[#allocation2 + $0xe0] sm:$0xff]
    %v1493 = vld [vmem:[#allocation2 + $0xe8] sm:$0xff]
    %v1494 = vld [vmem:[#allocation2 + $0xf0] sm:$0xff]
    %v1495 = vld [vmem:[#allocation2 + $0xf8] sm:$0xff]
    %v1496 = vld [vmem:[#allocation2 + $0x100] sm:$0xff]
    %v1497 = vld [vmem:[#allocation2 + $0x108] sm:$0xff]
    %v1498 = vld [vmem:[#allocation2 + $0x110] sm:$0xff]
    %v1499 = vld [vmem:[#allocation2 + $0x118] sm:$0xff]
    %v1500 = vld [vmem:[#allocation2 + $0x120] sm:$0xff]
    %v1501 = vld [vmem:[#allocation2 + $0x128] sm:$0xff]
    %v1502 = vld [vmem:[#allocation2 + $0x130] sm:$0xff]
    %v1503 = vld [vmem:[#allocation2 + $0x138] sm:$0xff]
    %v1504 = vld [vmem:[#allocation2 + $0x140] sm:$0xff]
    %v1505 = vld [vmem:[#allocation2 + $0x148] sm:$0xff]
    %v1506 = vld [vmem:[#allocation2 + $0x150] sm:$0xff]
    %v1507 = vld [vmem:[#allocation2 + $0x158] sm:$0xff]
    %v1508 = vld [vmem:[#allocation2 + $0x160] sm:$0xff]
    %v1509 = vld [vmem:[#allocation2 + $0x168] sm:$0xff]
    %v1510 = vld [vmem:[#allocation2 + $0x170] sm:$0xff]
    %v1511 = vld [vmem:[#allocation2 + $0x178] sm:$0xff]
    %v1512 = vld [vmem:[#allocation2 + $0x180] sm:$0xff]
    %v1513 = vld [vmem:[#allocation2 + $0x188] sm:$0xff]
    %v1514 = vld [vmem:[#allocation2 + $0x190] sm:$0xff]
    %v1515 = vld [vmem:[#allocation2 + $0x198] sm:$0xff]
    %v1516 = vld [vmem:[#allocation2 + $0x1a0] sm:$0xff]
    %v1517 = vld [vmem:[#allocation2 + $0x1a8] sm:$0xff]
    %v1518 = vld [vmem:[#allocation2 + $0x1b0] sm:$0xff]
    %v1519 = vld [vmem:[#allocation2 + $0x1b8] sm:$0xff]
    %v1520 = vld [vmem:[#allocation2 + $0x1c0] sm:$0xff]
    %v1521 = vld [vmem:[#allocation2 + $0x1c8] sm:$0xff]
    %v1522 = vld [vmem:[#allocation2 + $0x1d0] sm:$0xff]
    %v1523 = vld [vmem:[#allocation2 + $0x1d8] sm:$0xff]
    %v1524 = vld [vmem:[#allocation2 + $0x1e0] sm:$0xff]
    %v1525 = vld [vmem:[#allocation2 + $0x1e8] sm:$0xff]
    %v1526 = vld [vmem:[#allocation2 + $0x1f0] sm:$0xff]
    %v1527 = vld [vmem:[#allocation2 + $0x1f8] sm:$0xff]
    %1528 = vmatprep.subr.mxu0 %v1525
    %1529 = vmatpush1.msra.mxu0 %v1524
    %1530 = vmatprep.subr.mxu0 %v1521
    %1531 = vmatpush1.msra.mxu0 %v1520
    %1532 = vmatprep.subr.mxu0 %v1517
    %1533 = vmatpush1.msra.mxu0 %v1516
    %1534 = vmatprep.subr.mxu0 %v1513
    %1535 = vmatpush1.msra.mxu0 %v1512
    %1536 = vmatprep.subr.mxu0 %v1509
    %1537 = vmatpush1.msra.mxu0 %v1508
    %1538 = vmatprep.subr.mxu0 %v1505
    %1539 = vmatpush1.msra.mxu0 %v1504
    %1540 = vmatprep.subr.mxu0 %v1501
    %1541 = vmatpush1.msra.mxu0 %v1500
    %1542 = vmatprep.subr.mxu0 %v1497
    %1543 = vmatpush1.msra.mxu0 %v1496
    %1544 = vmatprep.subr.mxu0 %v1493
    %1545 = vmatpush1.msra.mxu0 %v1492
    %1546 = vmatprep.subr.mxu0 %v1489
    %1547 = vmatpush1.msra.mxu0 %v1488
    %1548 = vmatprep.subr.mxu0 %v1485
    %1549 = vmatpush1.msra.mxu0 %v1484
    %1550 = vmatprep.subr.mxu0 %v1481
    %1551 = vmatpush1.msra.mxu0 %v1480
    %1552 = vmatprep.subr.mxu0 %v1477
    %1553 = vmatpush1.msra.mxu0 %v1476
    %1554 = vmatprep.subr.mxu0 %v1473
    %1555 = vmatpush1.msra.mxu0 %v1472
    %1556 = vmatprep.subr.mxu0 %v1469
    %1557 = vmatpush1.msra.mxu0 %v1468
    %1558 = vmatprep.subr.mxu0 %v1465
    %1559 = vmatpush1.msra.mxu0 %v1464
    %1560 = vmatprep.subr.mxu0 0.0
    %1561 = vmatpush2.msra.mxu0 0.0
    %1562 = vmatprep.subr.mxu0 0.0
    %1563 = vmatpush2.msra.mxu0 0.0
    %1564 = vmatprep.subr.mxu0 0.0
    %1565 = vmatpush2.msra.mxu0 0.0
    %1566 = vmatprep.subr.mxu0 0.0
    %1567 = vmatpush2.msra.mxu0 0.0
    %1568 = vmatprep.subr.mxu0 0.0
    %1569 = vmatpush2.msra.mxu0 0.0
    %1570 = vmatprep.subr.mxu0 0.0
    %1571 = vmatpush2.msra.mxu0 0.0
    %1572 = vmatprep.subr.mxu0 0.0
    %1573 = vmatpush2.msra.mxu0 0.0
    %1574 = vmatprep.subr.mxu0 0.0
    %1575 = vmatpush2.msra.mxu0 0.0
    %1576 = vmatprep.subr.mxu0 0.0
    %1577 = vmatpush2.msra.mxu0 0.0
    %1578 = vmatprep.subr.mxu0 0.0
    %1579 = vmatpush2.msra.mxu0 0.0
    %1580 = vmatprep.subr.mxu0 0.0
    %1581 = vmatpush2.msra.mxu0 0.0
    %1582 = vmatprep.subr.mxu0 0.0
    %1583 = vmatpush2.msra.mxu0 0.0
    %1584 = vmatprep.subr.mxu0 0.0
    %1585 = vmatpush2.msra.mxu0 0.0
    %1586 = vmatprep.subr.mxu0 0.0
    %1587 = vmatpush2.msra.mxu0 0.0
    %1588 = vmatprep.subr.mxu0 0.0
    %1589 = vmatpush2.msra.mxu0 0.0
    %1590 = vmatprep.subr.mxu0 0.0
    %1591 = vmatpush2.msra.mxu0 0.0
    %1592 = vmatprep.mubr.f32.mxu0 0.0
    %1593 = vmatmul.mubr.f32.gmra.mxu0 %v1456
    %v1594 = vpop.f32.mrf.mxu0
    %v1595 = vadd.f32 0.0, %v1594
    %v1596 = vpop.f32.mrf.mxu0
    %v1597 = vadd.f32 0.0, %v1596
    %1598 = vdwg.mxu0
    %1599 = vmatprep.subr.mxu0 %v1527
    %1600 = vmatpush1.msra.mxu0 %v1526
    %1601 = vmatprep.subr.mxu0 %v1523
    %1602 = vmatpush1.msra.mxu0 %v1522
    %1603 = vmatprep.subr.mxu0 %v1519
    %1604 = vmatpush1.msra.mxu0 %v1518
    %1605 = vmatprep.subr.mxu0 %v1515
    %1606 = vmatpush1.msra.mxu0 %v1514
    %1607 = vmatprep.subr.mxu0 %v1511
    %1608 = vmatpush1.msra.mxu0 %v1510
    %1609 = vmatprep.subr.mxu0 %v1507
    %1610 = vmatpush1.msra.mxu0 %v1506
    %1611 = vmatprep.subr.mxu0 %v1503
    %1612 = vmatpush1.msra.mxu0 %v1502
    %1613 = vmatprep.subr.mxu0 %v1499
    %1614 = vmatpush1.msra.mxu0 %v1498
    %1615 = vmatprep.subr.mxu0 %v1495
    %1616 = vmatpush1.msra.mxu0 %v1494
    %1617 = vmatprep.subr.mxu0 %v1491
    %1618 = vmatpush1.msra.mxu0 %v1490
    %1619 = vmatprep.subr.mxu0 %v1487
    %1620 = vmatpush1.msra.mxu0 %v1486
    %1621 = vmatprep.subr.mxu0 %v1483
    %1622 = vmatpush1.msra.mxu0 %v1482
    %1623 = vmatprep.subr.mxu0 %v1479
    %1624 = vmatpush1.msra.mxu0 %v1478
    %1625 = vmatprep.subr.mxu0 %v1475
    %1626 = vmatpush1.msra.mxu0 %v1474
    %1627 = vmatprep.subr.mxu0 %v1471
    %1628 = vmatpush1.msra.mxu0 %v1470
    %1629 = vmatprep.subr.mxu0 %v1467
    %1630 = vmatpush1.msra.mxu0 %v1466
    %1631 = vmatprep.subr.mxu0 0.0
    %1632 = vmatpush2.msra.mxu0 0.0
    %1633 = vmatprep.subr.mxu0 0.0
    %1634 = vmatpush2.msra.mxu0 0.0
    %1635 = vmatprep.subr.mxu0 0.0
    %1636 = vmatpush2.msra.mxu0 0.0
    %1637 = vmatprep.subr.mxu0 0.0
    %1638 = vmatpush2.msra.mxu0 0.0
    %1639 = vmatprep.subr.mxu0 0.0
    %1640 = vmatpush2.msra.mxu0 0.0
    %1641 = vmatprep.subr.mxu0 0.0
    %1642 = vmatpush2.msra.mxu0 0.0
    %1643 = vmatprep.subr.mxu0 0.0
    %1644 = vmatpush2.msra.mxu0 0.0
    %1645 = vmatprep.subr.mxu0 0.0
    %1646 = vmatpush2.msra.mxu0 0.0
    %1647 = vmatprep.subr.mxu0 0.0
    %1648 = vmatpush2.msra.mxu0 0.0
    %1649 = vmatprep.subr.mxu0 0.0
    %1650 = vmatpush2.msra.mxu0 0.0
    %1651 = vmatprep.subr.mxu0 0.0
    %1652 = vmatpush2.msra.mxu0 0.0
    %1653 = vmatprep.subr.mxu0 0.0
    %1654 = vmatpush2.msra.mxu0 0.0
    %1655 = vmatprep.subr.mxu0 0.0
    %1656 = vmatpush2.msra.mxu0 0.0
    %1657 = vmatprep.subr.mxu0 0.0
    %1658 = vmatpush2.msra.mxu0 0.0
    %1659 = vmatprep.subr.mxu0 0.0
    %1660 = vmatpush2.msra.mxu0 0.0
    %1661 = vmatprep.subr.mxu0 0.0
    %1662 = vmatpush2.msra.mxu0 0.0
    %1663 = vmatprep.mubr.f32.mxu0 0.0
    %1664 = vmatmul.mubr.f32.gmra.mxu0 %v1456
    %v1665 = vpop.f32.mrf.mxu0
    %v1666 = vadd.f32 0.0, %v1665
    %v1667 = vpop.f32.mrf.mxu0
    %v1668 = vadd.f32 0.0, %v1667
    %1669 = vdwg.mxu0
    %v1670 = vadd.f32 %v1460, %v1595
    %v1671 = vadd.f32 %v1461, %v1597
    %v1672 = vadd.f32 %v1462, %v1666
    %v1673 = vadd.f32 %v1463, %v1668
    %v1674 = vmul.f32 %v1670, 0.5
    %v1675 = vtanh.pop %v1674
    %v1676 = vmul.f32 %v1675, 0.5
    %v1677 = vadd.f32 %v1676, 0.5
    %v1678 = vmul.f32 %v1671, 0.5
    %v1679 = vtanh.pop %v1678
    %v1680 = vmul.f32 %v1679, 0.5
    %v1681 = vadd.f32 %v1680, 0.5
    %v1682 = vtanh.pop %v1672
    %v1683 = vmul.f32 %v1673, 0.5
    %v1684 = vtanh.pop %v1683
    %v1685 = vmul.f32 %v1684, 0.5
    %v1686 = vadd.f32 %v1685, 0.5
    %v1687 = vmul.f32 %v1681, %v1454
    %v1688 = vmul.f32 %v1677, %v1682
    %v1689 = vadd.f32 %v1687, %v1688
    %v1690 = vtanh.pop %v1689
    %v1691 = vmul.f32 %v1686, %v1690
    %s1692 = scalar_lea.vmem [#allocation9], 48
    %1693 = vst [vmem:[%s1692] sm:$0xff] %v1691
    %s1694 = scalar_lea.vmem [#allocation6], 224
    %v1695 = vld [vmem:[%s1694] sm:$0xff]
    %v1696 = vld [vmem:[%s1694 + $0x8] sm:$0xff]
    %v1697 = vld [vmem:[%s1694 + $0x10] sm:$0xff]
    %v1698 = vld [vmem:[%s1694 + $0x18] sm:$0xff]
    %v1699 = vld [vmem:[#allocation2] sm:$0xff]
    %v1700 = vld [vmem:[#allocation2 + $0x8] sm:$0xff]
    %v1701 = vld [vmem:[#allocation2 + $0x10] sm:$0xff]
    %v1702 = vld [vmem:[#allocation2 + $0x18] sm:$0xff]
    %v1703 = vld [vmem:[#allocation2 + $0x20] sm:$0xff]
    %v1704 = vld [vmem:[#allocation2 + $0x28] sm:$0xff]
    %v1705 = vld [vmem:[#allocation2 + $0x30] sm:$0xff]
    %v1706 = vld [vmem:[#allocation2 + $0x38] sm:$0xff]
    %v1707 = vld [vmem:[#allocation2 + $0x40] sm:$0xff]
    %v1708 = vld [vmem:[#allocation2 + $0x48] sm:$0xff]
    %v1709 = vld [vmem:[#allocation2 + $0x50] sm:$0xff]
    %v1710 = vld [vmem:[#allocation2 + $0x58] sm:$0xff]
    %v1711 = vld [vmem:[#allocation2 + $0x60] sm:$0xff]
    %v1712 = vld [vmem:[#allocation2 + $0x68] sm:$0xff]
    %v1713 = vld [vmem:[#allocation2 + $0x70] sm:$0xff]
    %v1714 = vld [vmem:[#allocation2 + $0x78] sm:$0xff]
    %v1715 = vld [vmem:[#allocation2 + $0x80] sm:$0xff]
    %v1716 = vld [vmem:[#allocation2 + $0x88] sm:$0xff]
    %v1717 = vld [vmem:[#allocation2 + $0x90] sm:$0xff]
    %v1718 = vld [vmem:[#allocation2 + $0x98] sm:$0xff]
    %v1719 = vld [vmem:[#allocation2 + $0xa0] sm:$0xff]
    %v1720 = vld [vmem:[#allocation2 + $0xa8] sm:$0xff]
    %v1721 = vld [vmem:[#allocation2 + $0xb0] sm:$0xff]
    %v1722 = vld [vmem:[#allocation2 + $0xb8] sm:$0xff]
    %v1723 = vld [vmem:[#allocation2 + $0xc0] sm:$0xff]
    %v1724 = vld [vmem:[#allocation2 + $0xc8] sm:$0xff]
    %v1725 = vld [vmem:[#allocation2 + $0xd0] sm:$0xff]
    %v1726 = vld [vmem:[#allocation2 + $0xd8] sm:$0xff]
    %v1727 = vld [vmem:[#allocation2 + $0xe0] sm:$0xff]
    %v1728 = vld [vmem:[#allocation2 + $0xe8] sm:$0xff]
    %v1729 = vld [vmem:[#allocation2 + $0xf0] sm:$0xff]
    %v1730 = vld [vmem:[#allocation2 + $0xf8] sm:$0xff]
    %v1731 = vld [vmem:[#allocation2 + $0x100] sm:$0xff]
    %v1732 = vld [vmem:[#allocation2 + $0x108] sm:$0xff]
    %v1733 = vld [vmem:[#allocation2 + $0x110] sm:$0xff]
    %v1734 = vld [vmem:[#allocation2 + $0x118] sm:$0xff]
    %v1735 = vld [vmem:[#allocation2 + $0x120] sm:$0xff]
    %v1736 = vld [vmem:[#allocation2 + $0x128] sm:$0xff]
    %v1737 = vld [vmem:[#allocation2 + $0x130] sm:$0xff]
    %v1738 = vld [vmem:[#allocation2 + $0x138] sm:$0xff]
    %v1739 = vld [vmem:[#allocation2 + $0x140] sm:$0xff]
    %v1740 = vld [vmem:[#allocation2 + $0x148] sm:$0xff]
    %v1741 = vld [vmem:[#allocation2 + $0x150] sm:$0xff]
    %v1742 = vld [vmem:[#allocation2 + $0x158] sm:$0xff]
    %v1743 = vld [vmem:[#allocation2 + $0x160] sm:$0xff]
    %v1744 = vld [vmem:[#allocation2 + $0x168] sm:$0xff]
    %v1745 = vld [vmem:[#allocation2 + $0x170] sm:$0xff]
    %v1746 = vld [vmem:[#allocation2 + $0x178] sm:$0xff]
    %v1747 = vld [vmem:[#allocation2 + $0x180] sm:$0xff]
    %v1748 = vld [vmem:[#allocation2 + $0x188] sm:$0xff]
    %v1749 = vld [vmem:[#allocation2 + $0x190] sm:$0xff]
    %v1750 = vld [vmem:[#allocation2 + $0x198] sm:$0xff]
    %v1751 = vld [vmem:[#allocation2 + $0x1a0] sm:$0xff]
    %v1752 = vld [vmem:[#allocation2 + $0x1a8] sm:$0xff]
    %v1753 = vld [vmem:[#allocation2 + $0x1b0] sm:$0xff]
    %v1754 = vld [vmem:[#allocation2 + $0x1b8] sm:$0xff]
    %v1755 = vld [vmem:[#allocation2 + $0x1c0] sm:$0xff]
    %v1756 = vld [vmem:[#allocation2 + $0x1c8] sm:$0xff]
    %v1757 = vld [vmem:[#allocation2 + $0x1d0] sm:$0xff]
    %v1758 = vld [vmem:[#allocation2 + $0x1d8] sm:$0xff]
    %v1759 = vld [vmem:[#allocation2 + $0x1e0] sm:$0xff]
    %v1760 = vld [vmem:[#allocation2 + $0x1e8] sm:$0xff]
    %v1761 = vld [vmem:[#allocation2 + $0x1f0] sm:$0xff]
    %v1762 = vld [vmem:[#allocation2 + $0x1f8] sm:$0xff]
    %1763 = vmatprep.subr.mxu0 %v1760
    %1764 = vmatpush1.msra.mxu0 %v1759
    %1765 = vmatprep.subr.mxu0 %v1756
    %1766 = vmatpush1.msra.mxu0 %v1755
    %1767 = vmatprep.subr.mxu0 %v1752
    %1768 = vmatpush1.msra.mxu0 %v1751
    %1769 = vmatprep.subr.mxu0 %v1748
    %1770 = vmatpush1.msra.mxu0 %v1747
    %1771 = vmatprep.subr.mxu0 %v1744
    %1772 = vmatpush1.msra.mxu0 %v1743
    %1773 = vmatprep.subr.mxu0 %v1740
    %1774 = vmatpush1.msra.mxu0 %v1739
    %1775 = vmatprep.subr.mxu0 %v1736
    %1776 = vmatpush1.msra.mxu0 %v1735
    %1777 = vmatprep.subr.mxu0 %v1732
    %1778 = vmatpush1.msra.mxu0 %v1731
    %1779 = vmatprep.subr.mxu0 %v1728
    %1780 = vmatpush1.msra.mxu0 %v1727
    %1781 = vmatprep.subr.mxu0 %v1724
    %1782 = vmatpush1.msra.mxu0 %v1723
    %1783 = vmatprep.subr.mxu0 %v1720
    %1784 = vmatpush1.msra.mxu0 %v1719
    %1785 = vmatprep.subr.mxu0 %v1716
    %1786 = vmatpush1.msra.mxu0 %v1715
    %1787 = vmatprep.subr.mxu0 %v1712
    %1788 = vmatpush1.msra.mxu0 %v1711
    %1789 = vmatprep.subr.mxu0 %v1708
    %1790 = vmatpush1.msra.mxu0 %v1707
    %1791 = vmatprep.subr.mxu0 %v1704
    %1792 = vmatpush1.msra.mxu0 %v1703
    %1793 = vmatprep.subr.mxu0 %v1700
    %1794 = vmatpush1.msra.mxu0 %v1699
    %1795 = vmatprep.subr.mxu0 0.0
    %1796 = vmatpush2.msra.mxu0 0.0
    %1797 = vmatprep.subr.mxu0 0.0
    %1798 = vmatpush2.msra.mxu0 0.0
    %1799 = vmatprep.subr.mxu0 0.0
    %1800 = vmatpush2.msra.mxu0 0.0
    %1801 = vmatprep.subr.mxu0 0.0
    %1802 = vmatpush2.msra.mxu0 0.0
    %1803 = vmatprep.subr.mxu0 0.0
    %1804 = vmatpush2.msra.mxu0 0.0
    %1805 = vmatprep.subr.mxu0 0.0
    %1806 = vmatpush2.msra.mxu0 0.0
    %1807 = vmatprep.subr.mxu0 0.0
    %1808 = vmatpush2.msra.mxu0 0.0
    %1809 = vmatprep.subr.mxu0 0.0
    %1810 = vmatpush2.msra.mxu0 0.0
    %1811 = vmatprep.subr.mxu0 0.0
    %1812 = vmatpush2.msra.mxu0 0.0
    %1813 = vmatprep.subr.mxu0 0.0
    %1814 = vmatpush2.msra.mxu0 0.0
    %1815 = vmatprep.subr.mxu0 0.0
    %1816 = vmatpush2.msra.mxu0 0.0
    %1817 = vmatprep.subr.mxu0 0.0
    %1818 = vmatpush2.msra.mxu0 0.0
    %1819 = vmatprep.subr.mxu0 0.0
    %1820 = vmatpush2.msra.mxu0 0.0
    %1821 = vmatprep.subr.mxu0 0.0
    %1822 = vmatpush2.msra.mxu0 0.0
    %1823 = vmatprep.subr.mxu0 0.0
    %1824 = vmatpush2.msra.mxu0 0.0
    %1825 = vmatprep.subr.mxu0 0.0
    %1826 = vmatpush2.msra.mxu0 0.0
    %1827 = vmatprep.mubr.f32.mxu0 0.0
    %1828 = vmatmul.mubr.f32.gmra.mxu0 %v1691
    %v1829 = vpop.f32.mrf.mxu0
    %v1830 = vadd.f32 0.0, %v1829
    %v1831 = vpop.f32.mrf.mxu0
    %v1832 = vadd.f32 0.0, %v1831
    %1833 = vdwg.mxu0
    %1834 = vmatprep.subr.mxu0 %v1762
    %1835 = vmatpush1.msra.mxu0 %v1761
    %1836 = vmatprep.subr.mxu0 %v1758
    %1837 = vmatpush1.msra.mxu0 %v1757
    %1838 = vmatprep.subr.mxu0 %v1754
    %1839 = vmatpush1.msra.mxu0 %v1753
    %1840 = vmatprep.subr.mxu0 %v1750
    %1841 = vmatpush1.msra.mxu0 %v1749
    %1842 = vmatprep.subr.mxu0 %v1746
    %1843 = vmatpush1.msra.mxu0 %v1745
    %1844 = vmatprep.subr.mxu0 %v1742
    %1845 = vmatpush1.msra.mxu0 %v1741
    %1846 = vmatprep.subr.mxu0 %v1738
    %1847 = vmatpush1.msra.mxu0 %v1737
    %1848 = vmatprep.subr.mxu0 %v1734
    %1849 = vmatpush1.msra.mxu0 %v1733
    %1850 = vmatprep.subr.mxu0 %v1730
    %1851 = vmatpush1.msra.mxu0 %v1729
    %1852 = vmatprep.subr.mxu0 %v1726
    %1853 = vmatpush1.msra.mxu0 %v1725
    %1854 = vmatprep.subr.mxu0 %v1722
    %1855 = vmatpush1.msra.mxu0 %v1721
    %1856 = vmatprep.subr.mxu0 %v1718
    %1857 = vmatpush1.msra.mxu0 %v1717
    %1858 = vmatprep.subr.mxu0 %v1714
    %1859 = vmatpush1.msra.mxu0 %v1713
    %1860 = vmatprep.subr.mxu0 %v1710
    %1861 = vmatpush1.msra.mxu0 %v1709
    %1862 = vmatprep.subr.mxu0 %v1706
    %1863 = vmatpush1.msra.mxu0 %v1705
    %1864 = vmatprep.subr.mxu0 %v1702
    %1865 = vmatpush1.msra.mxu0 %v1701
    %1866 = vmatprep.subr.mxu0 0.0
    %1867 = vmatpush2.msra.mxu0 0.0
    %1868 = vmatprep.subr.mxu0 0.0
    %1869 = vmatpush2.msra.mxu0 0.0
    %1870 = vmatprep.subr.mxu0 0.0
    %1871 = vmatpush2.msra.mxu0 0.0
    %1872 = vmatprep.subr.mxu0 0.0
    %1873 = vmatpush2.msra.mxu0 0.0
    %1874 = vmatprep.subr.mxu0 0.0
    %1875 = vmatpush2.msra.mxu0 0.0
    %1876 = vmatprep.subr.mxu0 0.0
    %1877 = vmatpush2.msra.mxu0 0.0
    %1878 = vmatprep.subr.mxu0 0.0
    %1879 = vmatpush2.msra.mxu0 0.0
    %1880 = vmatprep.subr.mxu0 0.0
    %1881 = vmatpush2.msra.mxu0 0.0
    %1882 = vmatprep.subr.mxu0 0.0
    %1883 = vmatpush2.msra.mxu0 0.0
    %1884 = vmatprep.subr.mxu0 0.0
    %1885 = vmatpush2.msra.mxu0 0.0
    %1886 = vmatprep.subr.mxu0 0.0
    %1887 = vmatpush2.msra.mxu0 0.0
    %1888 = vmatprep.subr.mxu0 0.0
    %1889 = vmatpush2.msra.mxu0 0.0
    %1890 = vmatprep.subr.mxu0 0.0
    %1891 = vmatpush2.msra.mxu0 0.0
    %1892 = vmatprep.subr.mxu0 0.0
    %1893 = vmatpush2.msra.mxu0 0.0
    %1894 = vmatprep.subr.mxu0 0.0
    %1895 = vmatpush2.msra.mxu0 0.0
    %1896 = vmatprep.subr.mxu0 0.0
    %1897 = vmatpush2.msra.mxu0 0.0
    %1898 = vmatprep.mubr.f32.mxu0 0.0
    %1899 = vmatmul.mubr.f32.gmra.mxu0 %v1691
    %v1900 = vpop.f32.mrf.mxu0
    %v1901 = vadd.f32 0.0, %v1900
    %v1902 = vpop.f32.mrf.mxu0
    %v1903 = vadd.f32 0.0, %v1902
    %1904 = vdwg.mxu0
    %v1905 = vadd.f32 %v1695, %v1830
    %v1906 = vadd.f32 %v1696, %v1832
    %v1907 = vadd.f32 %v1697, %v1901
    %v1908 = vadd.f32 %v1698, %v1903
    %v1909 = vmul.f32 %v1905, 0.5
    %v1910 = vtanh.pop %v1909
    %v1911 = vmul.f32 %v1910, 0.5
    %v1912 = vadd.f32 %v1911, 0.5
    %v1913 = vmul.f32 %v1906, 0.5
    %v1914 = vtanh.pop %v1913
    %v1915 = vmul.f32 %v1914, 0.5
    %v1916 = vadd.f32 %v1915, 0.5
    %v1917 = vtanh.pop %v1907
    %v1918 = vmul.f32 %v1908, 0.5
    %v1919 = vtanh.pop %v1918
    %v1920 = vmul.f32 %v1919, 0.5
    %v1921 = vadd.f32 %v1920, 0.5
    %v1922 = vmul.f32 %v1916, %v1689
    %v1923 = vmul.f32 %v1912, %v1917
    %v1924 = vadd.f32 %v1922, %v1923
    %v1925 = vtanh.pop %v1924
    %v1926 = vmul.f32 %v1921, %v1925
    %s1927 = scalar_lea.vmem [#allocation9], 56
    %1928 = vst [vmem:[%s1927] sm:$0xff] %v1926
    %1929 = vst [vmem:[#allocation4] sm:$0xff] %v1926
    %1930 = vst [vmem:[#allocation5] sm:$0xff] %v1924
    // Predicated region
    $region18: #{tpu_custom_call.1} parent=1 // pred_check
      %p1931 = pneg %p28
    $region19: #{tpu_custom_call.1} parent=1 // pred_check_branch
      %1933 = sbr.rel (%p1931) target = $region21
    $region20: #{tpu_custom_call.1} parent=1 // pred_region
      %1934 = vst [vmem:[#allocation10] sm:$0xff] %v1926
      %1935 = vst [vmem:[#allocation12] sm:$0xff] %v1924
    $region21: #{tpu_custom_call.1} parent=1 // pred_fallthru
      _
    // Predicated region
    $region22: #{tpu_custom_call.1} parent=1 // pred_check
      _
    $region23: #{tpu_custom_call.1} parent=1 // pred_check_branch
      %1937 = sbr.rel (0) target = $region25
    $region24: #{tpu_custom_call.1} parent=1 // pred_region
      %s1939 = ssub.s32 1024, 1024
      %1940 = vsyncadd [#allocation8], %s1939
      %s1941 = sshll.u32 [#allocation9], 4
      %s1942 = int_to_ptr.vmem [resolvable:$true] %s1941
      %1947 = dma.vmem_to_hbm [thread:$0]  %s1942, 1024, %s2, [#allocation8], 128, 128, 8
    $region25: #{tpu_custom_call.1} parent=1 // pred_fallthru
      _
    // Predicated region
    $region26: #{tpu_custom_call.1} parent=1 // pred_check
      _
    $region27: #{tpu_custom_call.1} parent=1 // pred_check_branch
      %1949 = sbr.rel (0) target = $region29
    $region28: #{tpu_custom_call.1} parent=1 // pred_region
      %s1951 = ssub.s32 128, 128
      %1952 = vsyncadd [#allocation11], %s1951
      %s1954 = sshll.u32 [#allocation10], 4
      %s1955 = int_to_ptr.vmem [resolvable:$true] %s1954
      %1957 = dma.vmem_to_hbm [thread:$0]  %s1955, 128, %s3, [#allocation11]
    $region29: #{tpu_custom_call.1} parent=1 // pred_fallthru
      _
    // Predicated region
    $region30: #{tpu_custom_call.1} parent=1 // pred_check
      _
    $region31: #{tpu_custom_call.1} parent=1 // pred_check_branch
      %1959 = sbr.rel (0) target = $region33
    $region32: #{tpu_custom_call.1} parent=1 // pred_region
      %s1961 = ssub.s32 128, 128
      %1962 = vsyncadd [#allocation11], %s1961
      %s1964 = sshll.u32 [#allocation12], 4
      %s1965 = int_to_ptr.vmem [resolvable:$true] %s1964
      %1967 = dma.vmem_to_hbm [thread:$0]  %s1965, 128, %s4, [#allocation11]
    $region33: #{tpu_custom_call.1} parent=1 // pred_fallthru
      _
    // Predicated region
    $region34: #{tpu_custom_call.1} parent=1 // pred_check
      _
    $region35: #{tpu_custom_call.1} parent=1 // pred_check_branch
      %1969 = sbr.rel (0) target = $region37
    $region36: #{tpu_custom_call.1} parent=1 // pred_region
      %1970 = dma.done [#allocation8], 1024
    $region37: #{tpu_custom_call.1} parent=1 // pred_fallthru
      _
    // Predicated region
    $region38: #{tpu_custom_call.1} parent=1 // pred_check
      _
    $region39: #{tpu_custom_call.1} parent=1 // pred_check_branch
      %1972 = sbr.rel (0) target = $region41
    $region40: #{tpu_custom_call.1} parent=1 // pred_region
      %1973 = dma.done [#allocation11], 128
    $region41: #{tpu_custom_call.1} parent=1 // pred_fallthru
      _
    // Predicated region
    $region42: #{tpu_custom_call.1} parent=1 // pred_check
      _
    $region43: #{tpu_custom_call.1} parent=1 // pred_check_branch
      %1975 = sbr.rel (0) target = $region45
    $region44: #{tpu_custom_call.1} parent=1 // pred_region
      %1976 = dma.done [#allocation11], 128
    $region45: #{tpu_custom_call.1} parent=1 // pred_fallthru
      _
    %1977 = vsyncpa [#allocation7], 1
    %1978 = vsyncpa [#allocation8], 1
    %1979 = vsyncpa [#allocation11], 1
  %1980 = vsyncmov [#allocation3]
  %s1981 = vpop.sfrf %1980
  %p1982 = scmp.eq.s32.totalorder %s1981, 0
  %p1983 = pneg %p1982
  %1985 = shalt.err (%p1983)

</llo_original>
